<compile_context>
chip_gen: v6e
topology: v6e:2x2x1
jax: 0.10.0
libtpu: 0.0.40
codegen_flags: <defaults>
</compile_context>

<pallas_src>
import functools
import numpy as np
import jax
import jax.numpy as jnp
from jax.experimental import pallas as pl
from jax.experimental.pallas import tpu as pltpu


def _encoder_kernel(gx0_ref, m1_ref, m2_ref, whh_ref, wih_ref, brec_ref,
                    wh2_ref, bh2_ref,
                    h_out_ref, c_out_ref,
                    delay_scr, c_scr,
                    *, num_layers, ring, hidden_size):
    H = hidden_size
    L = num_layers
    chunk = gx0_ref.shape[0]          # timesteps handled by this grid step
    cdt = whh_ref.dtype               # compute dtype for MXU weight operands

    # Zero the persistent state (skip delay line + c) at the first time chunk
    # of each batch block.
    @pl.when(pl.program_id(1) == 0)
    def _():
        delay_scr[...] = jnp.zeros(delay_scr.shape, delay_scr.dtype)
        c_scr[...] = jnp.zeros(c_scr.shape, c_scr.dtype)

    # Load persistent state into registers once per chunk (off the per-step
    # critical path).  delay[k][l] == h of layer l produced k+1 steps ago, so
    # delay[0] is the current hidden state and delay[ring-1] is h_skip.
    delay0 = tuple(tuple(delay_scr[k * L + l] for l in range(L))
                   for k in range(ring))
    c0 = tuple(c_scr[l] for l in range(L))

    def step(tt, carry):
        delay, c_all = carry
        h_prev = delay[0]
        h_skip = delay[ring - 1]

        gx0_t = gx0_ref[tt]           # (B, 4H) layer-0 x@W_ih + b, precomputed
        m1_t = m1_ref[tt]             # (L, H)
        m2_t = m2_ref[tt]             # (L, H)

        # ---- work depending only on previous-step / delayed state: hoisted
        # off the serial layer chain so the scheduler can overlap it.
        rg = [jnp.dot(h_prev[l].astype(cdt), whh_ref[l],
                      preferred_element_type=jnp.float32) + brec_ref[l]
              for l in range(L)]
        # TODO(synk): if a bundle dump shows this sigmoid isn't hidden under
        # the serial chain, compute nh2 for step t+1 at the end of step t.
        nh2 = [jax.nn.sigmoid(jnp.dot(h_skip[l].astype(cdt), wh2_ref[l],
                                      preferred_element_type=jnp.float32)
                              + bh2_ref[l])
               for l in range(L)]

        new_h = []
        new_c = []
        inp = None
        for l in range(L):
            if l == 0:
                gates = gx0_t + rg[0]
            else:
                gates = jnp.dot(inp.astype(cdt), wih_ref[l - 1],
                                preferred_element_type=jnp.float32) + rg[l]

            # Gate columns were permuted to (i, f, o | g) in the wrapper:
            # one sigmoid over a contiguous 3H slice, one tanh over H.
            # TODO(synk): for H >= 512 compute these in 128-lane slices to
            # limit live vregs.
            sig = jax.nn.sigmoid(gates[:, :3 * H])
            g_g = jnp.tanh(gates[:, 3 * H:])
            i_g = sig[:, 0 * H:1 * H]
            f_g = sig[:, 1 * H:2 * H]
            o_g = sig[:, 2 * H:3 * H]

            c_new = f_g * c_all[l] + i_g * g_g
            h1 = o_g * jnp.tanh(c_new)
            h_new = h1 * m1_t[l][None, :] + nh2[l] * m2_t[l][None, :]

            new_h.append(h_new)
            new_c.append(c_new)
            inp = h_new

        new_delay = (tuple(new_h),) + delay[:ring - 1]
        return new_delay, tuple(new_c)

    delay_f, c_f = jax.lax.fori_loop(0, chunk, step, (delay0, c0))

    # Persist state for the next chunk; write the final h/c.  The output block
    # is the same for every time chunk, so it stays VMEM-resident and the HBM
    # writeback happens once per batch block.
    for k in range(ring):
        for l in range(L):
            delay_scr[k * L + l] = delay_f[k][l]
    for l in range(L):
        c_scr[l] = c_f[l]
        h_out_ref[l] = delay_f[0][l]
        c_out_ref[l] = c_f[l]


def encoder_forward(x, masks1, masks2, params, *, num_layers, skip_steps,
                    compute_dtype=jnp.float32, t_chunk=None, batch_blocks=None):
    T, B, I = x.shape
    H = params["whh"].shape[-1] // 4
    L = num_layers
    ring = skip_steps + 1

    # Permute PyTorch gate order (i, f, g, o) -> (i, f, o, g).
    perm = np.concatenate([np.arange(0, H), np.arange(H, 2 * H),
                           np.arange(3 * H, 4 * H), np.arange(2 * H, 3 * H)])
    wih0 = params["wih0"][:, perm]
    wih = params["wih"][:, :, perm]
    whh = params["whh"][:, :, perm]
    b = params["b"][:, :, perm].astype(jnp.float32)

    # Layer-0 input projection for every timestep as one parallel XLA matmul.
    # Always f32 (feeding the recurrence) so the 1e-5 check holds even when
    # compute_dtype is bf16.
    gx0 = (jnp.einsum('tbi,ig->tbg', x.astype(jnp.float32),
                      wih0.astype(jnp.float32)) + b[0]).astype(jnp.float32)

    whh_c = whh.astype(compute_dtype)                       # (L, H, 4H)
    wh2_c = params["wh2"].astype(compute_dtype)             # (L, H, H)
    bh2 = params["bh2"].astype(jnp.float32).reshape(L, 1, H)
    b_rec = b.at[0].set(0.0)                                # layer-0 bias already in gx0
    if L > 1:
        wih_rest = wih[:L - 1].astype(compute_dtype)        # (L-1, H, 4H)
    else:
        # TODO(synk): dummy (tiny) buffer when L == 1; never read.
        wih_rest = jnp.zeros((1, H, 4 * H), compute_dtype)

    # Lane-dense masks: (T, L, H), no size-1 sublane dim.
    masks1 = jnp.reshape(masks1, (T, L, H)).astype(jnp.float32)
    masks2 = jnp.reshape(masks2, (T, L, H)).astype(jnp.float32)

    # Time chunking: stream gx0 / masks through VMEM (DMA hidden behind the
    # latency-bound recurrence) instead of making the whole sequence resident.
    if t_chunk is None:
        t_chunk = min(T, 128)
    t_chunk = max(1, min(t_chunk, T))
    while T % t_chunk != 0:
        t_chunk -= 1
    nt = T // t_chunk

    # Optional batch split across TensorCores (v7x megacore).  Each block must
    # keep a sublane-aligned (multiple of 8) batch slice.
    if batch_blocks is None:
        batch_blocks = 2 if B % 16 == 0 else 1
    nb = batch_blocks
    BB = B // nb

    kernel = functools.partial(_encoder_kernel, num_layers=L, ring=ring,
                               hidden_size=H)

    def const(shape):
        n = len(shape)
        return pl.BlockSpec(shape, lambda bi, ti, _n=n: (0,) * _n)
    # TODO(synk): pipeline_mode=pl.Buffered(1) on the constant weight specs
    # would halve their (already small) double-buffered VMEM footprint.

    grid_spec = pltpu.PrefetchScalarGridSpec(
        num_scalar_prefetch=0,
        grid=(nb, nt),
        in_specs=[
            pl.BlockSpec((t_chunk, BB, 4 * H), lambda bi, ti: (ti, bi, 0)),  # gx0
            pl.BlockSpec((t_chunk, L, H), lambda bi, ti: (ti, 0, 0)),        # masks1
            pl.BlockSpec((t_chunk, L, H), lambda bi, ti: (ti, 0, 0)),        # masks2
            const(whh_c.shape),
            const(wih_rest.shape),
            const(b_rec.shape),
            const(wh2_c.shape),
            const(bh2.shape),
        ],
        out_specs=(pl.BlockSpec((L, BB, H), lambda bi, ti: (0, bi, 0)),
                   pl.BlockSpec((L, BB, H), lambda bi, ti: (0, bi, 0))),
        scratch_shapes=[
            pltpu.VMEM((ring * L, BB, H), jnp.float32),   # skip delay line (chunk boundary)
            pltpu.VMEM((L, BB, H), jnp.float32),          # c state (chunk boundary)
        ],
    )

    # Explicit VMEM budget: double-buffered streamed chunks + weights +
    # outputs + scratch (defaults: 16 MiB v5e / 32 MiB v6e,v7x scoped limits).
    def _pad(n, m):
        return ((n + m - 1) // m) * m
    wb = jnp.dtype(compute_dtype).itemsize
    est = 0
    est += 2 * t_chunk * _pad(BB, 8) * _pad(4 * H, 128) * 4               # gx0 chunks
    est += 2 * 2 * t_chunk * _pad(L, 8) * _pad(H, 128) * 4                # mask chunks
    est += 2 * (L + max(L - 1, 1)) * _pad(H, 8) * _pad(4 * H, 128) * wb   # whh + wih
    est += 2 * L * _pad(H, 8) * _pad(H, 128) * wb                         # wh2
    est += 2 * L * 8 * (_pad(4 * H, 128) + _pad(H, 128)) * 4              # biases
    est += (2 * 2 + ring + 1) * L * _pad(BB, 8) * _pad(H, 128) * 4        # outs + scratch
    vmem_limit = int(min(max(est + (8 << 20), 32 << 20), 100 << 20))

    h_fin, c_fin = pl.pallas_call(
        kernel,
        out_shape=(jax.ShapeDtypeStruct((L, B, H), jnp.float32),
                   jax.ShapeDtypeStruct((L, B, H), jnp.float32)),
        grid_spec=grid_spec,
        compiler_params=pltpu.CompilerParams(
            dimension_semantics=("parallel", "arbitrary"),
            vmem_limit_bytes=vmem_limit),
    )(gx0, masks1, masks2, whh_c, wih_rest, b_rec, wh2_c, bh2)
    return h_fin, c_fin


def encoder_reference(x, masks1, masks2, params, *, num_layers, skip_steps):
    """Pure-JAX replica of the PyTorch sLSTMCell stack forward (verification)."""
    T, B, I = x.shape
    H = params["whh"].shape[-1] // 4
    h = [jnp.zeros((B, H), jnp.float32) for _ in range(num_layers)]
    c = [jnp.zeros((B, H), jnp.float32) for _ in range(num_layers)]
    buffers = [[] for _ in range(num_layers)]
    for t in range(T):
        inp = x[t]
        for l in range(num_layers):
            w_ih = params["wih0"] if l == 0 else params["wih"][l - 1]
            gates = inp @ w_ih + h[l] @ params["whh"][l] + params["b"][l]
            i_g = jax.nn.sigmoid(gates[:, :H])
            f_g = jax.nn.sigmoid(gates[:, H:2 * H])
            g_g = jnp.tanh(gates[:, 2 * H:3 * H])
            o_g = jax.nn.sigmoid(gates[:, 3 * H:])
            new_c = f_g * c[l] + i_g * g_g
            new_h1 = o_g * jnp.tanh(new_c)
            buffers[l].append(h[l])
            if len(buffers[l]) > skip_steps:
                h_skip = buffers[l].pop(0)
            else:
                h_skip = jnp.zeros_like(h[l])
            new_h2 = jax.nn.sigmoid(h_skip @ params["wh2"][l] + params["bh2"][l])
            new_h = new_h1 * masks1[t, l] + new_h2 * masks2[t, l]
            h[l], c[l] = new_h, new_c
            inp = new_h
    return jnp.stack(h), jnp.stack(c)


if __name__ == "__main__":
    T, B, I, H, L, SKIP = 8, 8, 16, 32, 2, 1

    key = jax.random.PRNGKey(0)
    keys = jax.random.split(key, 8)
    x = jax.random.normal(keys[0], (T, B, I), jnp.float32)

    params = dict(
        # nn.LSTMCell weights, transposed: weight_ih.T -> (in, 4H), weight_hh.T -> (H, 4H)
        wih0=0.1 * jax.random.normal(keys[1], (I, 4 * H), jnp.float32),
        wih=0.1 * jax.random.normal(keys[2], (max(L - 1, 1), H, 4 * H), jnp.float32),
        whh=0.1 * jax.random.normal(keys[3], (L, H, 4 * H), jnp.float32),
        b=0.1 * jax.random.normal(keys[4], (L, 1, 4 * H), jnp.float32),  # bias_ih + bias_hh
        wh2=0.1 * jax.random.normal(keys[5], (L, H, H), jnp.float32),    # weight_h_2 (trunc_normal std=0.1)
        bh2=jnp.zeros((L, 1, H), jnp.float32),                           # bias_h_2 = 0
    )

    # Per-(layer, step) masks replicating sLSTMCell.masked_weight with a fixed
    # seed per cell (host-side RNG, passed in as lane-dense (T, L, H) arrays).
    m1 = np.zeros((T, L, H), np.float32)
    m2 = np.zeros((T, L, H), np.float32)
    for l in range(L):
        rng = np.random.RandomState(1234 + l)
        for t in range(T):
            comb = rng.randint(0, 3, size=H)
            m1[t, l] = ((comb == 0) | (comb == 2)).astype(np.float32)
            m2[t, l] = ((comb == 1) | (comb == 2)).astype(np.float32)
    masks1 = jnp.asarray(m1)
    masks2 = jnp.asarray(m2)

    # t_chunk=4 -> two time chunks, exercising the cross-chunk state carry.
    h_fin, c_fin = encoder_forward(x, masks1, masks2, params,
                                   num_layers=L, skip_steps=SKIP, t_chunk=4)
    jax.block_until_ready((h_fin, c_fin))

    h_ref, c_ref = encoder_reference(x, masks1, masks2, params,
                                     num_layers=L, skip_steps=SKIP)
    np.testing.assert_allclose(np.asarray(h_fin), np.asarray(h_ref), rtol=1e-5, atol=1e-5)
    np.testing.assert_allclose(np.asarray(c_fin), np.asarray(c_ref), rtol=1e-5, atol=1e-5)

    print("KERNEL_OK")
</pallas_src>

<mosaic_0001>
module attributes {stable_mosaic.version = 11 : i64} {
  func.func @_encoder_kernel(%arg0: i32, %arg1: i32, %arg2: memref<4x8x128xf32, #tpu.memory_space<vmem>>, %arg3: memref<4x2x32xf32, #tpu.memory_space<vmem>>, %arg4: memref<4x2x32xf32, #tpu.memory_space<vmem>>, %arg5: memref<2x32x128xf32, #tpu.memory_space<vmem>>, %arg6: memref<1x32x128xf32, #tpu.memory_space<vmem>>, %arg7: memref<2x1x128xf32, #tpu.memory_space<vmem>>, %arg8: memref<2x32x32xf32, #tpu.memory_space<vmem>>, %arg9: memref<2x1x32xf32, #tpu.memory_space<vmem>>, %arg10: memref<2x8x32xf32, #tpu.memory_space<vmem>>, %arg11: memref<2x8x32xf32, #tpu.memory_space<vmem>>, %arg12: memref<4x8x32xf32, #tpu.memory_space<vmem>>, %arg13: memref<2x8x32xf32, #tpu.memory_space<vmem>>) attributes {dimension_semantics = [#tpu.dimension_semantics<parallel>, #tpu.dimension_semantics<arbitrary>], iteration_bounds = array<i64: 1, 2>, scalar_prefetch = 0 : i64, scratch_operands = 2 : i64, tpu.core_type = #tpu.core_type<tc>, window_params = [{transform_indices = @transform_0, window_bounds = array<i64: 4, 8, 128>}, {transform_indices = @transform_1, window_bounds = array<i64: 4, 2, 32>}, {transform_indices = @transform_2, window_bounds = array<i64: 4, 2, 32>}, {pipeline_mode = #tpu.pipeline_mode<synchronous>, transform_indices = @transform_3, window_bounds = array<i64: 2, 32, 128>}, {pipeline_mode = #tpu.pipeline_mode<synchronous>, transform_indices = @transform_4, window_bounds = array<i64: 1, 32, 128>}, {pipeline_mode = #tpu.pipeline_mode<synchronous>, transform_indices = @transform_5, window_bounds = array<i64: 2, 1, 128>}, {pipeline_mode = #tpu.pipeline_mode<synchronous>, transform_indices = @transform_6, window_bounds = array<i64: 2, 32, 32>}, {pipeline_mode = #tpu.pipeline_mode<synchronous>, transform_indices = @transform_7, window_bounds = array<i64: 2, 1, 32>}, {transform_indices = @transform_8, window_bounds = array<i64: 2, 8, 32>}, {transform_indices = @transform_9, window_bounds = array<i64: 2, 8, 32>}]} {
    %c0_i32 = arith.constant 0 : i32
    %0 = arith.cmpi eq, %arg1, %c0_i32 : i32
    %1 = arith.extui %0 : i1 to i32
    %c0_i32_0 = arith.constant 0 : i32
    %2 = arith.cmpi ne, %1, %c0_i32_0 : i32
    scf.if %2 {
      %cst = arith.constant 0.000000e+00 : f32
      %47 = vector.broadcast %cst : f32 to vector<4x8x32xf32>
      %c0_47 = arith.constant 0 : index
      %c0_48 = arith.constant 0 : index
      %c0_49 = arith.constant 0 : index
      %48 = vector.load %arg12[%c0_47, %c0_48, %c0_49] : memref<4x8x32xf32, #tpu.memory_space<vmem>>, vector<4x8x32xf32>
      tpu.vector_store %arg12[%c0_47, %c0_48, %c0_49], %47 {strides = array<i32>} : memref<4x8x32xf32, #tpu.memory_space<vmem>>, vector<4x8x32xf32>,
      %cst_50 = arith.constant 0.000000e+00 : f32
      %49 = vector.broadcast %cst_50 : f32 to vector<2x8x32xf32>
      %c0_51 = arith.constant 0 : index
      %c0_52 = arith.constant 0 : index
      %c0_53 = arith.constant 0 : index
      %50 = vector.load %arg13[%c0_51, %c0_52, %c0_53] : memref<2x8x32xf32, #tpu.memory_space<vmem>>, vector<2x8x32xf32>
      tpu.vector_store %arg13[%c0_51, %c0_52, %c0_53], %49 {strides = array<i32>} : memref<2x8x32xf32, #tpu.memory_space<vmem>>, vector<2x8x32xf32>,
    } else {
    }
    %c0 = arith.constant 0 : index
    %c0_1 = arith.constant 0 : index
    %c0_2 = arith.constant 0 : index
    %3 = vector.load %arg12[%c0, %c0_1, %c0_2] : memref<4x8x32xf32, #tpu.memory_space<vmem>>, vector<1x8x32xf32>
    %4 = vector.shape_cast %3 : vector<1x8x32xf32> to vector<8x32xf32>
    %c1 = arith.constant 1 : index
    %c0_3 = arith.constant 0 : index
    %c0_4 = arith.constant 0 : index
    %5 = vector.load %arg12[%c1, %c0_3, %c0_4] : memref<4x8x32xf32, #tpu.memory_space<vmem>>, vector<1x8x32xf32>
    %6 = vector.shape_cast %5 : vector<1x8x32xf32> to vector<8x32xf32>
    %c2 = arith.constant 2 : index
    %c0_5 = arith.constant 0 : index
    %c0_6 = arith.constant 0 : index
    %7 = vector.load %arg12[%c2, %c0_5, %c0_6] : memref<4x8x32xf32, #tpu.memory_space<vmem>>, vector<1x8x32xf32>
    %8 = vector.shape_cast %7 : vector<1x8x32xf32> to vector<8x32xf32>
    %c3 = arith.constant 3 : index
    %c0_7 = arith.constant 0 : index
    %c0_8 = arith.constant 0 : index
    %9 = vector.load %arg12[%c3, %c0_7, %c0_8] : memref<4x8x32xf32, #tpu.memory_space<vmem>>, vector<1x8x32xf32>
    %10 = vector.shape_cast %9 : vector<1x8x32xf32> to vector<8x32xf32>
    %c0_9 = arith.constant 0 : index
    %c0_10 = arith.constant 0 : index
    %c0_11 = arith.constant 0 : index
    %11 = vector.load %arg13[%c0_9, %c0_10, %c0_11] : memref<2x8x32xf32, #tpu.memory_space<vmem>>, vector<1x8x32xf32>
    %12 = vector.shape_cast %11 : vector<1x8x32xf32> to vector<8x32xf32>
    %c1_12 = arith.constant 1 : index
    %c0_13 = arith.constant 0 : index
    %c0_14 = arith.constant 0 : index
    %13 = vector.load %arg13[%c1_12, %c0_13, %c0_14] : memref<2x8x32xf32, #tpu.memory_space<vmem>>, vector<1x8x32xf32>
    %14 = vector.shape_cast %13 : vector<1x8x32xf32> to vector<8x32xf32>
    %c0_i32_15 = arith.constant 0 : i32
    %c4_i32 = arith.constant 4 : i32
    %15 = arith.addi %c0_i32_15, %c4_i32 : i32
    %c1_i32 = arith.constant 1 : i32
    %16:6 = scf.for %arg14 = %c0_i32_15 to %15 step %c1_i32 iter_args(%arg15 = %4, %arg16 = %6, %arg17 = %8, %arg18 = %10, %arg19 = %12, %arg20 = %14) -> (vector<8x32xf32>, vector<8x32xf32>, vector<8x32xf32>, vector<8x32xf32>, vector<8x32xf32>, vector<8x32xf32>)  : i32 {
      %47 = arith.index_cast %arg14 : i32 to index
      %c0_47 = arith.constant 0 : index
      %c0_48 = arith.constant 0 : index
      %48 = vector.load %arg2[%47, %c0_47, %c0_48] : memref<4x8x128xf32, #tpu.memory_space<vmem>>, vector<1x8x128xf32>
      %49 = vector.shape_cast %48 : vector<1x8x128xf32> to vector<8x128xf32>
      %50 = arith.index_cast %arg14 : i32 to index
      %c0_49 = arith.constant 0 : index
      %c0_50 = arith.constant 0 : index
      %51 = vector.load %arg3[%50, %c0_49, %c0_50] : memref<4x2x32xf32, #tpu.memory_space<vmem>>, vector<1x2x32xf32>
      %52 = vector.shape_cast %51 : vector<1x2x32xf32> to vector<2x32xf32>
      %53 = arith.index_cast %arg14 : i32 to index
      %c0_51 = arith.constant 0 : index
      %c0_52 = arith.constant 0 : index
      %54 = vector.load %arg4[%53, %c0_51, %c0_52] : memref<4x2x32xf32, #tpu.memory_space<vmem>>, vector<1x2x32xf32>
      %55 = vector.shape_cast %54 : vector<1x2x32xf32> to vector<2x32xf32>
      %c0_53 = arith.constant 0 : index
      %c0_54 = arith.constant 0 : index
      %c0_55 = arith.constant 0 : index
      %56 = vector.load %arg5[%c0_53, %c0_54, %c0_55] : memref<2x32x128xf32, #tpu.memory_space<vmem>>, vector<1x32x128xf32>
      %57 = vector.shape_cast %56 : vector<1x32x128xf32> to vector<32x128xf32>
      %cst = arith.constant dense<0.000000e+00> : vector<8x128xf32>
      %58 = tpu.matmul %arg15, %57, %cst {dimension_numbers = #tpu.dot_dimension_numbers<[1], [0], [0], [1], [0, 0, 1, 1], [], []>} : vector<8x32xf32>, vector<32x128xf32>, vector<8x128xf32> -> vector<8x128xf32>
      %c0_56 = arith.constant 0 : index
      %c0_57 = arith.constant 0 : index
      %c0_58 = arith.constant 0 : index
      %59 = vector.load %arg7[%c0_56, %c0_57, %c0_58] : memref<2x1x128xf32, #tpu.memory_space<vmem>>, vector<1x1x128xf32>
      %60 = vector.shape_cast %59 : vector<1x1x128xf32> to vector<1x128xf32>
      %61 = vector.broadcast %60 : vector<1x128xf32> to vector<8x128xf32>
      %62 = arith.addf %58, %61 : vector<8x128xf32>
      %c1_59 = arith.constant 1 : index
      %c0_60 = arith.constant 0 : index
      %c0_61 = arith.constant 0 : index
      %63 = vector.load %arg5[%c1_59, %c0_60, %c0_61] : memref<2x32x128xf32, #tpu.memory_space<vmem>>, vector<1x32x128xf32>
      %64 = vector.shape_cast %63 : vector<1x32x128xf32> to vector<32x128xf32>
      %cst_62 = arith.constant dense<0.000000e+00> : vector<8x128xf32>
      %65 = tpu.matmul %arg16, %64, %cst_62 {dimension_numbers = #tpu.dot_dimension_numbers<[1], [0], [0], [1], [0, 0, 1, 1], [], []>} : vector<8x32xf32>, vector<32x128xf32>, vector<8x128xf32> -> vector<8x128xf32>
      %c1_63 = arith.constant 1 : index
      %c0_64 = arith.constant 0 : index
      %c0_65 = arith.constant 0 : index
      %66 = vector.load %arg7[%c1_63, %c0_64, %c0_65] : memref<2x1x128xf32, #tpu.memory_space<vmem>>, vector<1x1x128xf32>
      %67 = vector.shape_cast %66 : vector<1x1x128xf32> to vector<1x128xf32>
      %68 = vector.broadcast %67 : vector<1x128xf32> to vector<8x128xf32>
      %69 = arith.addf %65, %68 : vector<8x128xf32>
      %c0_66 = arith.constant 0 : index
      %c0_67 = arith.constant 0 : index
      %c0_68 = arith.constant 0 : index
      %70 = vector.load %arg8[%c0_66, %c0_67, %c0_68] : memref<2x32x32xf32, #tpu.memory_space<vmem>>, vector<1x32x32xf32>
      %71 = vector.shape_cast %70 : vector<1x32x32xf32> to vector<32x32xf32>
      %cst_69 = arith.constant dense<0.000000e+00> : vector<8x32xf32>
      %72 = tpu.matmul %arg17, %71, %cst_69 {dimension_numbers = #tpu.dot_dimension_numbers<[1], [0], [0], [1], [0, 0, 1, 1], [], []>} : vector<8x32xf32>, vector<32x32xf32>, vector<8x32xf32> -> vector<8x32xf32>
      %c0_70 = arith.constant 0 : index
      %c0_71 = arith.constant 0 : index
      %c0_72 = arith.constant 0 : index
      %73 = vector.load %arg9[%c0_70, %c0_71, %c0_72] : memref<2x1x32xf32, #tpu.memory_space<vmem>>, vector<1x1x32xf32>
      %74 = vector.shape_cast %73 : vector<1x1x32xf32> to vector<1x32xf32>
      %75 = vector.broadcast %74 : vector<1x32xf32> to vector<8x32xf32>
      %76 = arith.addf %72, %75 : vector<8x32xf32>
      %77 = arith.negf %76 : vector<8x32xf32>
      %78 = math.exp %77 : vector<8x32xf32>
      %cst_73 = arith.constant 1.000000e+00 : f32
      %79 = vector.broadcast %cst_73 : f32 to vector<8x32xf32>
      %80 = arith.addf %79, %78 : vector<8x32xf32>
      %81 = arith.divf %79, %80 : vector<8x32xf32>
      %c1_74 = arith.constant 1 : index
      %c0_75 = arith.constant 0 : index
      %c0_76 = arith.constant 0 : index
      %82 = vector.load %arg8[%c1_74, %c0_75, %c0_76] : memref<2x32x32xf32, #tpu.memory_space<vmem>>, vector<1x32x32xf32>
      %83 = vector.shape_cast %82 : vector<1x32x32xf32> to vector<32x32xf32>
      %cst_77 = arith.constant dense<0.000000e+00> : vector<8x32xf32>
      %84 = tpu.matmul %arg18, %83, %cst_77 {dimension_numbers = #tpu.dot_dimension_numbers<[1], [0], [0], [1], [0, 0, 1, 1], [], []>} : vector<8x32xf32>, vector<32x32xf32>, vector<8x32xf32> -> vector<8x32xf32>
      %c1_78 = arith.constant 1 : index
      %c0_79 = arith.constant 0 : index
      %c0_80 = arith.constant 0 : index
      %85 = vector.load %arg9[%c1_78, %c0_79, %c0_80] : memref<2x1x32xf32, #tpu.memory_space<vmem>>, vector<1x1x32xf32>
      %86 = vector.shape_cast %85 : vector<1x1x32xf32> to vector<1x32xf32>
      %87 = vector.broadcast %86 : vector<1x32xf32> to vector<8x32xf32>
      %88 = arith.addf %84, %87 : vector<8x32xf32>
      %89 = arith.negf %88 : vector<8x32xf32>
      %90 = math.exp %89 : vector<8x32xf32>
      %cst_81 = arith.constant 1.000000e+00 : f32
      %91 = vector.broadcast %cst_81 : f32 to vector<8x32xf32>
      %92 = arith.addf %91, %90 : vector<8x32xf32>
      %93 = arith.divf %91, %92 : vector<8x32xf32>
      %94 = arith.addf %49, %62 : vector<8x128xf32>
      %95 = vector.extract_strided_slice %94 {offsets = [0, 0], sizes = [8, 96], strides = [1, 1]} : vector<8x128xf32> to vector<8x96xf32>
      %96 = arith.negf %95 : vector<8x96xf32>
      %97 = math.exp %96 : vector<8x96xf32>
      %cst_82 = arith.constant 1.000000e+00 : f32
      %98 = vector.broadcast %cst_82 : f32 to vector<8x96xf32>
      %99 = arith.addf %98, %97 : vector<8x96xf32>
      %100 = arith.divf %98, %99 : vector<8x96xf32>
      %101 = vector.extract_strided_slice %94 {offsets = [0, 96], sizes = [8, 32], strides = [1, 1]} : vector<8x128xf32> to vector<8x32xf32>
      %102 = math.tanh %101 : vector<8x32xf32>
      %103 = vector.extract_strided_slice %100 {offsets = [0, 0], sizes = [8, 32], strides = [1, 1]} : vector<8x96xf32> to vector<8x32xf32>
      %104 = vector.extract_strided_slice %100 {offsets = [0, 32], sizes = [8, 32], strides = [1, 1]} : vector<8x96xf32> to vector<8x32xf32>
      %105 = vector.extract_strided_slice %100 {offsets = [0, 64], sizes = [8, 32], strides = [1, 1]} : vector<8x96xf32> to vector<8x32xf32>
      %106 = arith.mulf %104, %arg19 : vector<8x32xf32>
      %107 = arith.mulf %103, %102 : vector<8x32xf32>
      %108 = arith.addf %106, %107 : vector<8x32xf32>
      %109 = math.tanh %108 : vector<8x32xf32>
      %110 = arith.mulf %105, %109 : vector<8x32xf32>
      %111 = vector.extract_strided_slice %52 {offsets = [0, 0], sizes = [1, 32], strides = [1, 1]} : vector<2x32xf32> to vector<1x32xf32>
      %112 = vector.shape_cast %111 : vector<1x32xf32> to vector<32xf32>
      %113 = vector.shape_cast %112 : vector<32xf32> to vector<1x32xf32>
      %114 = vector.broadcast %113 : vector<1x32xf32> to vector<8x32xf32>
      %115 = arith.mulf %110, %114 : vector<8x32xf32>
      %116 = vector.extract_strided_slice %55 {offsets = [0, 0], sizes = [1, 32], strides = [1, 1]} : vector<2x32xf32> to vector<1x32xf32>
      %117 = vector.shape_cast %116 : vector<1x32xf32> to vector<32xf32>
      %118 = vector.shape_cast %117 : vector<32xf32> to vector<1x32xf32>
      %119 = vector.broadcast %118 : vector<1x32xf32> to vector<8x32xf32>
      %120 = arith.mulf %81, %119 : vector<8x32xf32>
      %121 = arith.addf %115, %120 : vector<8x32xf32>
      %c0_83 = arith.constant 0 : index
      %c0_84 = arith.constant 0 : index
      %c0_85 = arith.constant 0 : index
      %122 = vector.load %arg6[%c0_83, %c0_84, %c0_85] : memref<1x32x128xf32, #tpu.memory_space<vmem>>, vector<1x32x128xf32>
      %123 = vector.shape_cast %122 : vector<1x32x128xf32> to vector<32x128xf32>
      %cst_86 = arith.constant dense<0.000000e+00> : vector<8x128xf32>
      %124 = tpu.matmul %121, %123, %cst_86 {dimension_numbers = #tpu.dot_dimension_numbers<[1], [0], [0], [1], [0, 0, 1, 1], [], []>} : vector<8x32xf32>, vector<32x128xf32>, vector<8x128xf32> -> vector<8x128xf32>
      %125 = arith.addf %124, %69 : vector<8x128xf32>
      %126 = vector.extract_strided_slice %125 {offsets = [0, 0], sizes = [8, 96], strides = [1, 1]} : vector<8x128xf32> to vector<8x96xf32>
      %127 = arith.negf %126 : vector<8x96xf32>
      %128 = math.exp %127 : vector<8x96xf32>
      %cst_87 = arith.constant 1.000000e+00 : f32
      %129 = vector.broadcast %cst_87 : f32 to vector<8x96xf32>
      %130 = arith.addf %129, %128 : vector<8x96xf32>
      %131 = arith.divf %129, %130 : vector<8x96xf32>
      %132 = vector.extract_strided_slice %125 {offsets = [0, 96], sizes = [8, 32], strides = [1, 1]} : vector<8x128xf32> to vector<8x32xf32>
      %133 = math.tanh %132 : vector<8x32xf32>
      %134 = vector.extract_strided_slice %131 {offsets = [0, 0], sizes = [8, 32], strides = [1, 1]} : vector<8x96xf32> to vector<8x32xf32>
      %135 = vector.extract_strided_slice %131 {offsets = [0, 32], sizes = [8, 32], strides = [1, 1]} : vector<8x96xf32> to vector<8x32xf32>
      %136 = vector.extract_strided_slice %131 {offsets = [0, 64], sizes = [8, 32], strides = [1, 1]} : vector<8x96xf32> to vector<8x32xf32>
      %137 = arith.mulf %135, %arg20 : vector<8x32xf32>
      %138 = arith.mulf %134, %133 : vector<8x32xf32>
      %139 = arith.addf %137, %138 : vector<8x32xf32>
      %140 = math.tanh %139 : vector<8x32xf32>
      %141 = arith.mulf %136, %140 : vector<8x32xf32>
      %142 = vector.extract_strided_slice %52 {offsets = [1, 0], sizes = [1, 32], strides = [1, 1]} : vector<2x32xf32> to vector<1x32xf32>
      %143 = vector.shape_cast %142 : vector<1x32xf32> to vector<32xf32>
      %144 = vector.shape_cast %143 : vector<32xf32> to vector<1x32xf32>
      %145 = vector.broadcast %144 : vector<1x32xf32> to vector<8x32xf32>
      %146 = arith.mulf %141, %145 : vector<8x32xf32>
      %147 = vector.extract_strided_slice %55 {offsets = [1, 0], sizes = [1, 32], strides = [1, 1]} : vector<2x32xf32> to vector<1x32xf32>
      %148 = vector.shape_cast %147 : vector<1x32xf32> to vector<32xf32>
      %149 = vector.shape_cast %148 : vector<32xf32> to vector<1x32xf32>
      %150 = vector.broadcast %149 : vector<1x32xf32> to vector<8x32xf32>
      %151 = arith.mulf %93, %150 : vector<8x32xf32>
      %152 = arith.addf %146, %151 : vector<8x32xf32>
      scf.yield %121, %152, %arg15, %arg16, %108, %139 : vector<8x32xf32>, vector<8x32xf32>, vector<8x32xf32>, vector<8x32xf32>, vector<8x32xf32>, vector<8x32xf32>
    }
    %c4_i32_16 = arith.constant 4 : i32
    %c0_17 = arith.constant 0 : index
    %c0_18 = arith.constant 0 : index
    %c0_19 = arith.constant 0 : index
    %17 = vector.load %arg12[%c0_17, %c0_18, %c0_19] : memref<4x8x32xf32, #tpu.memory_space<vmem>>, vector<1x8x32xf32>
    %18 = vector.shape_cast %17 : vector<1x8x32xf32> to vector<8x32xf32>
    %19 = vector.shape_cast %16#0 : vector<8x32xf32> to vector<1x8x32xf32>
    tpu.vector_store %arg12[%c0_17, %c0_18, %c0_19], %19 {strides = array<i32>} : memref<4x8x32xf32, #tpu.memory_space<vmem>>, vector<1x8x32xf32>,
    %c1_20 = arith.constant 1 : index
    %c0_21 = arith.constant 0 : index
    %c0_22 = arith.constant 0 : index
    %20 = vector.load %arg12[%c1_20, %c0_21, %c0_22] : memref<4x8x32xf32, #tpu.memory_space<vmem>>, vector<1x8x32xf32>
    %21 = vector.shape_cast %20 : vector<1x8x32xf32> to vector<8x32xf32>
    %22 = vector.shape_cast %16#1 : vector<8x32xf32> to vector<1x8x32xf32>
    tpu.vector_store %arg12[%c1_20, %c0_21, %c0_22], %22 {strides = array<i32>} : memref<4x8x32xf32, #tpu.memory_space<vmem>>, vector<1x8x32xf32>,
    %c2_23 = arith.constant 2 : index
    %c0_24 = arith.constant 0 : index
    %c0_25 = arith.constant 0 : index
    %23 = vector.load %arg12[%c2_23, %c0_24, %c0_25] : memref<4x8x32xf32, #tpu.memory_space<vmem>>, vector<1x8x32xf32>
    %24 = vector.shape_cast %23 : vector<1x8x32xf32> to vector<8x32xf32>
    %25 = vector.shape_cast %16#2 : vector<8x32xf32> to vector<1x8x32xf32>
    tpu.vector_store %arg12[%c2_23, %c0_24, %c0_25], %25 {strides = array<i32>} : memref<4x8x32xf32, #tpu.memory_space<vmem>>, vector<1x8x32xf32>,
    %c3_26 = arith.constant 3 : index
    %c0_27 = arith.constant 0 : index
    %c0_28 = arith.constant 0 : index
    %26 = vector.load %arg12[%c3_26, %c0_27, %c0_28] : memref<4x8x32xf32, #tpu.memory_space<vmem>>, vector<1x8x32xf32>
    %27 = vector.shape_cast %26 : vector<1x8x32xf32> to vector<8x32xf32>
    %28 = vector.shape_cast %16#3 : vector<8x32xf32> to vector<1x8x32xf32>
    tpu.vector_store %arg12[%c3_26, %c0_27, %c0_28], %28 {strides = array<i32>} : memref<4x8x32xf32, #tpu.memory_space<vmem>>, vector<1x8x32xf32>,
    %c0_29 = arith.constant 0 : index
    %c0_30 = arith.constant 0 : index
    %c0_31 = arith.constant 0 : index
    %29 = vector.load %arg13[%c0_29, %c0_30, %c0_31] : memref<2x8x32xf32, #tpu.memory_space<vmem>>, vector<1x8x32xf32>
    %30 = vector.shape_cast %29 : vector<1x8x32xf32> to vector<8x32xf32>
    %31 = vector.shape_cast %16#4 : vector<8x32xf32> to vector<1x8x32xf32>
    tpu.vector_store %arg13[%c0_29, %c0_30, %c0_31], %31 {strides = array<i32>} : memref<2x8x32xf32, #tpu.memory_space<vmem>>, vector<1x8x32xf32>,
    %c0_32 = arith.constant 0 : index
    %c0_33 = arith.constant 0 : index
    %c0_34 = arith.constant 0 : index
    %32 = vector.load %arg10[%c0_32, %c0_33, %c0_34] : memref<2x8x32xf32, #tpu.memory_space<vmem>>, vector<1x8x32xf32>
    %33 = vector.shape_cast %32 : vector<1x8x32xf32> to vector<8x32xf32>
    %34 = vector.shape_cast %16#0 : vector<8x32xf32> to vector<1x8x32xf32>
    tpu.vector_store %arg10[%c0_32, %c0_33, %c0_34], %34 {strides = array<i32>} : memref<2x8x32xf32, #tpu.memory_space<vmem>>, vector<1x8x32xf32>,
    %c0_35 = arith.constant 0 : index
    %c0_36 = arith.constant 0 : index
    %c0_37 = arith.constant 0 : index
    %35 = vector.load %arg11[%c0_35, %c0_36, %c0_37] : memref<2x8x32xf32, #tpu.memory_space<vmem>>, vector<1x8x32xf32>
    %36 = vector.shape_cast %35 : vector<1x8x32xf32> to vector<8x32xf32>
    %37 = vector.shape_cast %16#4 : vector<8x32xf32> to vector<1x8x32xf32>
    tpu.vector_store %arg11[%c0_35, %c0_36, %c0_37], %37 {strides = array<i32>} : memref<2x8x32xf32, #tpu.memory_space<vmem>>, vector<1x8x32xf32>,
    %c1_38 = arith.constant 1 : index
    %c0_39 = arith.constant 0 : index
    %c0_40 = arith.constant 0 : index
    %38 = vector.load %arg13[%c1_38, %c0_39, %c0_40] : memref<2x8x32xf32, #tpu.memory_space<vmem>>, vector<1x8x32xf32>
    %39 = vector.shape_cast %38 : vector<1x8x32xf32> to vector<8x32xf32>
    %40 = vector.shape_cast %16#5 : vector<8x32xf32> to vector<1x8x32xf32>
    tpu.vector_store %arg13[%c1_38, %c0_39, %c0_40], %40 {strides = array<i32>} : memref<2x8x32xf32, #tpu.memory_space<vmem>>, vector<1x8x32xf32>,
    %c1_41 = arith.constant 1 : index
    %c0_42 = arith.constant 0 : index
    %c0_43 = arith.constant 0 : index
    %41 = vector.load %arg10[%c1_41, %c0_42, %c0_43] : memref<2x8x32xf32, #tpu.memory_space<vmem>>, vector<1x8x32xf32>
    %42 = vector.shape_cast %41 : vector<1x8x32xf32> to vector<8x32xf32>
    %43 = vector.shape_cast %16#1 : vector<8x32xf32> to vector<1x8x32xf32>
    tpu.vector_store %arg10[%c1_41, %c0_42, %c0_43], %43 {strides = array<i32>} : memref<2x8x32xf32, #tpu.memory_space<vmem>>, vector<1x8x32xf32>,
    %c1_44 = arith.constant 1 : index
    %c0_45 = arith.constant 0 : index
    %c0_46 = arith.constant 0 : index
    %44 = vector.load %arg11[%c1_44, %c0_45, %c0_46] : memref<2x8x32xf32, #tpu.memory_space<vmem>>, vector<1x8x32xf32>
    %45 = vector.shape_cast %44 : vector<1x8x32xf32> to vector<8x32xf32>
    %46 = vector.shape_cast %16#5 : vector<8x32xf32> to vector<1x8x32xf32>
    tpu.vector_store %arg11[%c1_44, %c0_45, %c0_46], %46 {strides = array<i32>} : memref<2x8x32xf32, #tpu.memory_space<vmem>>, vector<1x8x32xf32>,
    return
  }
  func.func @transform_0(%arg0: i32, %arg1: i32) -> (i32, i32, i32) {
    %c0_i32 = arith.constant 0 : i32
    %c0_i32_0 = arith.constant 0 : i32
    return %arg1, %arg0, %c0_i32 : i32, i32, i32
  }
  func.func @transform_1(%arg0: i32, %arg1: i32) -> (i32, i32, i32) {
    %c0_i32 = arith.constant 0 : i32
    %c0_i32_0 = arith.constant 0 : i32
    %c0_i32_1 = arith.constant 0 : i32
    return %arg1, %c0_i32, %c0_i32_0 : i32, i32, i32
  }
  func.func @transform_2(%arg0: i32, %arg1: i32) -> (i32, i32, i32) {
    %c0_i32 = arith.constant 0 : i32
    %c0_i32_0 = arith.constant 0 : i32
    %c0_i32_1 = arith.constant 0 : i32
    return %arg1, %c0_i32, %c0_i32_0 : i32, i32, i32
  }
  func.func @transform_3(%arg0: i32, %arg1: i32) -> (i32, i32, i32) {
    %c0_i32 = arith.constant 0 : i32
    %c0_i32_0 = arith.constant 0 : i32
    %c0_i32_1 = arith.constant 0 : i32
    %c0_i32_2 = arith.constant 0 : i32
    return %c0_i32, %c0_i32_0, %c0_i32_1 : i32, i32, i32
  }
  func.func @transform_4(%arg0: i32, %arg1: i32) -> (i32, i32, i32) {
    %c0_i32 = arith.constant 0 : i32
    %c0_i32_0 = arith.constant 0 : i32
    %c0_i32_1 = arith.constant 0 : i32
    %c0_i32_2 = arith.constant 0 : i32
    return %c0_i32, %c0_i32_0, %c0_i32_1 : i32, i32, i32
  }
  func.func @transform_5(%arg0: i32, %arg1: i32) -> (i32, i32, i32) {
    %c0_i32 = arith.constant 0 : i32
    %c0_i32_0 = arith.constant 0 : i32
    %c0_i32_1 = arith.constant 0 : i32
    %c0_i32_2 = arith.constant 0 : i32
    return %c0_i32, %c0_i32_0, %c0_i32_1 : i32, i32, i32
  }
  func.func @transform_6(%arg0: i32, %arg1: i32) -> (i32, i32, i32) {
    %c0_i32 = arith.constant 0 : i32
    %c0_i32_0 = arith.constant 0 : i32
    %c0_i32_1 = arith.constant 0 : i32
    %c0_i32_2 = arith.constant 0 : i32
    return %c0_i32, %c0_i32_0, %c0_i32_1 : i32, i32, i32
  }
  func.func @transform_7(%arg0: i32, %arg1: i32) -> (i32, i32, i32) {
    %c0_i32 = arith.constant 0 : i32
    %c0_i32_0 = arith.constant 0 : i32
    %c0_i32_1 = arith.constant 0 : i32
    %c0_i32_2 = arith.constant 0 : i32
    return %c0_i32, %c0_i32_0, %c0_i32_1 : i32, i32, i32
  }
  func.func @transform_8(%arg0: i32, %arg1: i32) -> (i32, i32, i32) {
    %c0_i32 = arith.constant 0 : i32
    %c0_i32_0 = arith.constant 0 : i32
    %c0_i32_1 = arith.constant 0 : i32
    return %c0_i32, %arg0, %c0_i32_0 : i32, i32, i32
  }
  func.func @transform_9(%arg0: i32, %arg1: i32) -> (i32, i32, i32) {
    %c0_i32 = arith.constant 0 : i32
    %c0_i32_0 = arith.constant 0 : i32
    %c0_i32_1 = arith.constant 0 : i32
    return %c0_i32, %arg0, %c0_i32_0 : i32, i32, i32
  }
}

</mosaic_0001>

<llo_original>
// kernel: tpu_custom_call.1
$region0: #{tpu_custom_call.1}
  #allocation0 [shape = 'u32[]', space=smem, size = 0x4, offset = 0x4, fixed_abs, tag = 'smem constant byte address 0x4 - core index']
  #allocation1 [shape = 'u32[144,128]{1,0:T(1,128)}', space=vmem, size = 0x12000, scoped, tag = 'internal scratch']
  #allocation2 [shape = 'f32[4,8,32]{2,1,0:T(8,128)}', space=vmem, size = 0x4000, scoped, tag = 'scratch operand']
  #allocation3 [shape = 'f32[2,8,32]{2,1,0:T(8,128)}', space=vmem, size = 0x2000, scoped, tag = 'scratch operand']
  %s0 = inlined_call_operand.hbm [shape: f32[8,8,128], index: 0, kind: input, shape index: {}]
  %s1 = inlined_call_operand.hbm [shape: f32[8,2,32], index: 1, kind: input, shape index: {}]
  %s2 = inlined_call_operand.hbm [shape: f32[8,2,32], index: 2, kind: input, shape index: {}]
  %s3 = inlined_call_operand.hbm [shape: f32[2,32,128], index: 3, kind: input, shape index: {}]
  %s4 = inlined_call_operand.hbm [shape: f32[1,32,128], index: 4, kind: input, shape index: {}]
  %s5 = inlined_call_operand.vmem [shape: f32[2,1,128], index: 5, kind: input, shape index: {}]
  %s6 = inlined_call_operand.hbm [shape: f32[2,32,32], index: 6, kind: input, shape index: {}]
  %s7 = inlined_call_operand.vmem [shape: f32[2,1,32], index: 7, kind: input, shape index: {}]
  %s8 = inlined_call_operand.hbm [shape: f32[2,8,32], index: 8, kind: output, shape index: {0}]
  %s9 = inlined_call_operand.hbm [shape: f32[2,8,32], index: 9, kind: output, shape index: {1}]
  %10 = xla_tuple %s8, %s9
  %s11 = sld [smem:[#allocation0]]
  $region108: #{tpu_custom_call.1} parent=0
    _
  %s13 = ssub.s32 1, %s11
  %s14 = scalar_select 0, %s13, %s11
  $region1: #{tpu_custom_call.1} parent=0
    #allocation4 [shape = 'u8[32768]{0}', space=vmem, size = 0x8000, scoped, tag = 'input window, operand 0']
    #allocation5 [shape = 's32[2]{0}', space=sflag, size = 0x8, scoped, tag = 'scoped memory for tpu_custom_call.1']
    #allocation6 [shape = 's32[2]{0}', space=sflag, size = 0x8, scoped, tag = 'scoped memory for tpu_custom_call.1']
    #allocation7 [shape = 'u8[8192]{0}', space=vmem, size = 0x2000, scoped, tag = 'input window, operand 1']
    #allocation8 [shape = 's32[2]{0}', space=sflag, size = 0x8, scoped, tag = 'scoped memory for tpu_custom_call.1']
    #allocation9 [shape = 'u8[8192]{0}', space=vmem, size = 0x2000, scoped, tag = 'input window, operand 2']
    #allocation10 [shape = 'u8[32768]{0}', space=vmem, size = 0x8000, scoped, tag = 'input window, operand 3, single buffered']
    #allocation11 [shape = 's32[1]{0}', space=sflag, size = 0x4, scoped, tag = 'scoped memory for tpu_custom_call.1']
    #allocation12 [shape = 'u8[16384]{0}', space=vmem, size = 0x4000, scoped, tag = 'input window, operand 4, single buffered']
    #allocation13 [shape = 'u8[32768]{0}', space=vmem, size = 0x8000, scoped, tag = 'input window, operand 6, single buffered']
    #allocation14 [shape = 's32[1]{0}', space=sflag, size = 0x4, scoped, tag = 'scoped memory for tpu_custom_call.1']
    #allocation15 [shape = 'u8[8192]{0}', space=vmem, size = 0x2000, scoped, tag = 'output window, operand 0, single buffered']
    #allocation16 [shape = 'u8[8192]{0}', space=vmem, size = 0x2000, scoped, tag = 'output window, operand 1, single buffered']
    #allocation17 [shape = 's32[1]{0}', space=sflag, size = 0x4, scoped, tag = 'scoped memory for tpu_custom_call.1']
    %15 = vsyncpa [#allocation5], 0
    %s16 = scalar_lea.sflag [#allocation5], 1
    %17 = vsyncpa %s16, 0
    %18 = vsyncpa [#allocation8], 0
    %s19 = scalar_lea.sflag [#allocation8], 1
    %20 = vsyncpa %s19, 0
    %21 = vsyncpa [#allocation11], 0
    %22 = vsyncpa [#allocation14], 0
    %23 = vsyncpa [#allocation6], 0
    %24 = vsyncpa [#allocation17], 0
    loop: start=0, step=1, limit=4
    $region2: #{tpu_custom_call.1} parent=1 // loop_pre_header
      _
    $region3: #{tpu_custom_call.1} parent=1 // loop_header
      %s26 = sphi 0, %s30
      %p27 = scmp.ge.s32.totalorder %s26, 4
      %s33 = sphi 0, %s45
      %s34 = sphi 0, %s41
      %s35 = sphi 0, %s33
      %s36 = sphi 0, %s34
      %s37 = sphi 0, %s35
      %s38 = sphi 0, %s36
      %s50 = sphi 0, %s52
      %s53 = sphi 0, %s50
      %s54 = sphi 0, %s53
      %s70 = sphi 0, %s54
      %s76 = sphi 0, %s78
      %s79 = sphi 0, %s76
      %s80 = sphi 0, %s79
      %s96 = sphi 0, %s80
      %s102 = sphi 0, %s104
      %s105 = sphi 0, %s102
      %s106 = sphi 0, %s105
      %s122 = sphi 0, %s106
      %s126 = sphi 0, %s126
      %s128 = sphi 0, %s126
      %s129 = sphi 0, %s128
      %s143 = sphi 0, %s129
      %s147 = sphi 0, %s147
      %s149 = sphi 0, %s147
      %s150 = sphi 0, %s149
      %s164 = sphi 0, %s150
      %s168 = sphi 0, %s168
      %s170 = sphi 0, %s168
      %s171 = sphi 0, %s170
      %s185 = sphi 0, %s171
      %s189 = sphi 0, %s189
      %s191 = sphi 0, %s189
      %s192 = sphi 0, %s191
      %s206 = sphi 0, %s192
      %s210 = sphi 0, %s210
      %s212 = sphi 0, %s210
      %s213 = sphi 0, %s212
      %s227 = sphi 0, %s213
      %s233 = sphi 0, %s235
      %s236 = sphi 0, %s233
      %s237 = sphi 0, %s236
      %s253 = sphi 0, %s237
      %s259 = sphi 0, %s261
      %s262 = sphi 0, %s259
      %s263 = sphi 0, %s262
      %s279 = sphi 0, %s263
    $region4: #{tpu_custom_call.1} parent=1 // loop_header_branch
      %29 = sbr.rel (%p27) target = $region8
    $region5: #{tpu_custom_call.1} parent=1 // loop_body
      %s31 = ssub.s32 %s26, 1
      %s32 = ssub.s32 %s26, 2
      %s39 = sadd.s32 1, %s34
      %p40 = scmp.ge.s32.totalorder %s39, 2
      %s41 = scalar_select %p40, 0, %s39
      %s42 = sadd.s32 1, %s33
      %s43 = scalar_select %p40, %s42, %s33
      %p44 = scmp.ge.s32.totalorder %s43, 1
      %s45 = scalar_select %p44, 0, %s43
      %s46 = ssub.s32 %s34, %s41
      %s47 = ssub.s32 %s33, %s45
      %s48 = sor.u32 %s46, %s47
      %p49 = scmp.eq.s32.totalorder %s48, 0
      %s51 = sadd.s32 %s50, 1
      %s52 = scalar_select %p49, %s50, %s51
      %p55 = pneg %p49
      %p56 = scmp.eq.s32.totalorder %s26, 1
      %p57 = por %p55, %p56
      %p58 = scmp.ne.s32.totalorder %s50, %s53
      %p59 = scmp.eq.s32.totalorder %s26, 0
      %p60 = por %p58, %p59
      %p61 = scmp.ne.s32.totalorder %s50, %s53
      %p62 = scmp.eq.s32.totalorder %s31, 1
      %p63 = por %p61, %p62
      %p64 = scmp.ne.s32.totalorder %s53, %s54
      %p65 = scmp.eq.s32.totalorder %s31, 0
      %p66 = por %p64, %p65
      %p67 = scmp.ne.s32.totalorder %s53, %s54
      %p68 = scmp.eq.s32.totalorder %s32, 1
      %p69 = por %p67, %p68
      %p71 = scmp.ne.s32.totalorder %s54, %s70
      %p72 = scmp.eq.s32.totalorder %s32, 0
      %p73 = por %p71, %p72
      %s74 = ssub.s32 %s34, %s41
      %p75 = scmp.eq.s32.totalorder %s74, 0
      %s77 = sadd.s32 %s76, 1
      %s78 = scalar_select %p75, %s76, %s77
      %p81 = pneg %p75
      %p82 = scmp.eq.s32.totalorder %s26, 1
      %p83 = por %p81, %p82
      %p84 = scmp.ne.s32.totalorder %s76, %s79
      %p85 = scmp.eq.s32.totalorder %s26, 0
      %p86 = por %p84, %p85
      %p87 = scmp.ne.s32.totalorder %s76, %s79
      %p88 = scmp.eq.s32.totalorder %s31, 1
      %p89 = por %p87, %p88
      %p90 = scmp.ne.s32.totalorder %s79, %s80
      %p91 = scmp.eq.s32.totalorder %s31, 0
      %p92 = por %p90, %p91
      %p93 = scmp.ne.s32.totalorder %s79, %s80
      %p94 = scmp.eq.s32.totalorder %s32, 1
      %p95 = por %p93, %p94
      %p97 = scmp.ne.s32.totalorder %s80, %s96
      %p98 = scmp.eq.s32.totalorder %s32, 0
      %p99 = por %p97, %p98
      %s100 = ssub.s32 %s34, %s41
      %p101 = scmp.eq.s32.totalorder %s100, 0
      %s103 = sadd.s32 %s102, 1
      %s104 = scalar_select %p101, %s102, %s103
      %p107 = pneg %p101
      %p108 = scmp.eq.s32.totalorder %s26, 1
      %p109 = por %p107, %p108
      %p110 = scmp.ne.s32.totalorder %s102, %s105
      %p111 = scmp.eq.s32.totalorder %s26, 0
      %p112 = por %p110, %p111
      %p113 = scmp.ne.s32.totalorder %s102, %s105
      %p114 = scmp.eq.s32.totalorder %s31, 1
      %p115 = por %p113, %p114
      %p116 = scmp.ne.s32.totalorder %s105, %s106
      %p117 = scmp.eq.s32.totalorder %s31, 0
      %p118 = por %p116, %p117
      %p119 = scmp.ne.s32.totalorder %s105, %s106
      %p120 = scmp.eq.s32.totalorder %s32, 1
      %p121 = por %p119, %p120
      %p123 = scmp.ne.s32.totalorder %s106, %s122
      %p124 = scmp.eq.s32.totalorder %s32, 0
      %p125 = por %p123, %p124
      %s127 = sadd.s32 %s126, 1
      %p130 = scmp.eq.s32.totalorder %s26, 1
      %p131 = scmp.ne.s32.totalorder %s126, %s128
      %p132 = scmp.eq.s32.totalorder %s26, 0
      %p133 = por %p131, %p132
      %p134 = scmp.ne.s32.totalorder %s126, %s128
      %p135 = scmp.eq.s32.totalorder %s31, 1
      %p136 = por %p134, %p135
      %p137 = scmp.ne.s32.totalorder %s128, %s129
      %p138 = scmp.eq.s32.totalorder %s31, 0
      %p139 = por %p137, %p138
      %p140 = scmp.ne.s32.totalorder %s128, %s129
      %p141 = scmp.eq.s32.totalorder %s32, 1
      %p142 = por %p140, %p141
      %p144 = scmp.ne.s32.totalorder %s129, %s143
      %p145 = scmp.eq.s32.totalorder %s32, 0
      %p146 = por %p144, %p145
      %s148 = sadd.s32 %s147, 1
      %p151 = scmp.eq.s32.totalorder %s26, 1
      %p152 = scmp.ne.s32.totalorder %s147, %s149
      %p153 = scmp.eq.s32.totalorder %s26, 0
      %p154 = por %p152, %p153
      %p155 = scmp.ne.s32.totalorder %s147, %s149
      %p156 = scmp.eq.s32.totalorder %s31, 1
      %p157 = por %p155, %p156
      %p158 = scmp.ne.s32.totalorder %s149, %s150
      %p159 = scmp.eq.s32.totalorder %s31, 0
      %p160 = por %p158, %p159
      %p161 = scmp.ne.s32.totalorder %s149, %s150
      %p162 = scmp.eq.s32.totalorder %s32, 1
      %p163 = por %p161, %p162
      %p165 = scmp.ne.s32.totalorder %s150, %s164
      %p166 = scmp.eq.s32.totalorder %s32, 0
      %p167 = por %p165, %p166
      %s169 = sadd.s32 %s168, 1
      %p172 = scmp.eq.s32.totalorder %s26, 1
      %p173 = scmp.ne.s32.totalorder %s168, %s170
      %p174 = scmp.eq.s32.totalorder %s26, 0
      %p175 = por %p173, %p174
      %p176 = scmp.ne.s32.totalorder %s168, %s170
      %p177 = scmp.eq.s32.totalorder %s31, 1
      %p178 = por %p176, %p177
      %p179 = scmp.ne.s32.totalorder %s170, %s171
      %p180 = scmp.eq.s32.totalorder %s31, 0
      %p181 = por %p179, %p180
      %p182 = scmp.ne.s32.totalorder %s170, %s171
      %p183 = scmp.eq.s32.totalorder %s32, 1
      %p184 = por %p182, %p183
      %p186 = scmp.ne.s32.totalorder %s171, %s185
      %p187 = scmp.eq.s32.totalorder %s32, 0
      %p188 = por %p186, %p187
      %s190 = sadd.s32 %s189, 1
      %p193 = scmp.eq.s32.totalorder %s26, 1
      %p194 = scmp.ne.s32.totalorder %s189, %s191
      %p195 = scmp.eq.s32.totalorder %s26, 0
      %p196 = por %p194, %p195
      %p197 = scmp.ne.s32.totalorder %s189, %s191
      %p198 = scmp.eq.s32.totalorder %s31, 1
      %p199 = por %p197, %p198
      %p200 = scmp.ne.s32.totalorder %s191, %s192
      %p201 = scmp.eq.s32.totalorder %s31, 0
      %p202 = por %p200, %p201
      %p203 = scmp.ne.s32.totalorder %s191, %s192
      %p204 = scmp.eq.s32.totalorder %s32, 1
      %p205 = por %p203, %p204
      %p207 = scmp.ne.s32.totalorder %s192, %s206
      %p208 = scmp.eq.s32.totalorder %s32, 0
      %p209 = por %p207, %p208
      %s211 = sadd.s32 %s210, 1
      %p214 = scmp.eq.s32.totalorder %s26, 1
      %p215 = scmp.ne.s32.totalorder %s210, %s212
      %p216 = scmp.eq.s32.totalorder %s26, 0
      %p217 = por %p215, %p216
      %p218 = scmp.ne.s32.totalorder %s210, %s212
      %p219 = scmp.eq.s32.totalorder %s31, 1
      %p220 = por %p218, %p219
      %p221 = scmp.ne.s32.totalorder %s212, %s213
      %p222 = scmp.eq.s32.totalorder %s31, 0
      %p223 = por %p221, %p222
      %p224 = scmp.ne.s32.totalorder %s212, %s213
      %p225 = scmp.eq.s32.totalorder %s32, 1
      %p226 = por %p224, %p225
      %p228 = scmp.ne.s32.totalorder %s213, %s227
      %p229 = scmp.eq.s32.totalorder %s32, 0
      %p230 = por %p228, %p229
      %s231 = ssub.s32 %s33, %s45
      %p232 = scmp.eq.s32.totalorder %s231, 0
      %s234 = sadd.s32 %s233, 1
      %s235 = scalar_select %p232, %s233, %s234
      %p238 = pneg %p232
      %p239 = scmp.eq.s32.totalorder %s26, 1
      %p240 = por %p238, %p239
      %p241 = scmp.ne.s32.totalorder %s233, %s236
      %p242 = scmp.eq.s32.totalorder %s26, 0
      %p243 = por %p241, %p242
      %p244 = scmp.ne.s32.totalorder %s233, %s236
      %p245 = scmp.eq.s32.totalorder %s31, 1
      %p246 = por %p244, %p245
      %p247 = scmp.ne.s32.totalorder %s236, %s237
      %p248 = scmp.eq.s32.totalorder %s31, 0
      %p249 = por %p247, %p248
      %p250 = scmp.ne.s32.totalorder %s236, %s237
      %p251 = scmp.eq.s32.totalorder %s32, 1
      %p252 = por %p250, %p251
      %p254 = scmp.ne.s32.totalorder %s237, %s253
      %p255 = scmp.eq.s32.totalorder %s32, 0
      %p256 = por %p254, %p255
      %s257 = ssub.s32 %s33, %s45
      %p258 = scmp.eq.s32.totalorder %s257, 0
      %s260 = sadd.s32 %s259, 1
      %s261 = scalar_select %p258, %s259, %s260
      %p264 = pneg %p258
      %p265 = scmp.eq.s32.totalorder %s26, 1
      %p266 = por %p264, %p265
      %p267 = scmp.ne.s32.totalorder %s259, %s262
      %p268 = scmp.eq.s32.totalorder %s26, 0
      %p269 = por %p267, %p268
      %p270 = scmp.ne.s32.totalorder %s259, %s262
      %p271 = scmp.eq.s32.totalorder %s31, 1
      %p272 = por %p270, %p271
      %p273 = scmp.ne.s32.totalorder %s262, %s263
      %p274 = scmp.eq.s32.totalorder %s31, 0
      %p275 = por %p273, %p274
      %p276 = scmp.ne.s32.totalorder %s262, %s263
      %p277 = scmp.eq.s32.totalorder %s32, 1
      %p278 = por %p276, %p277
      %p280 = scmp.ne.s32.totalorder %s263, %s279
      %p281 = scmp.eq.s32.totalorder %s32, 0
      %p282 = por %p280, %p281
      %p283 = scmp.le.s32.totalorder 1, %s26
      %p284 = scmp.lt.s32.totalorder %s26, 3
      %p285 = pnand %p283, %p284
      %p286 = pneg %p285
      // Predicated region
      $region9: #{tpu_custom_call.1} parent=5 // pred_check
        _
      $region10: #{tpu_custom_call.1} parent=5 // pred_check_branch
        %288 = sbr.rel (%p285) target = $region12
      $region11: #{tpu_custom_call.1} parent=5 // pred_region
        %s289 = ssub.s32 %s26, 1
        // Predicated region
        $region13: #{tpu_custom_call.1} parent=11 // pred_check
          %p290 = pneg %p139
        $region14: #{tpu_custom_call.1} parent=11 // pred_check_branch
          %292 = sbr.rel (%p290) target = $region16
        $region15: #{tpu_custom_call.1} parent=11 // pred_region
          %s294 = ssub.s32 1024, 1024
          %295 = vsyncadd [#allocation11], %s294
          %s296 = sshll.u32 [#allocation10], 4
          %s297 = int_to_ptr.vmem [resolvable:$true] %s296
          %302 = dma.hbm_to_vmem [thread:$0]  %s3, 1024, %s297, [#allocation11], 128, 128, 8
        $region16: #{tpu_custom_call.1} parent=11 // pred_fallthru
          _
        // Predicated region
        $region17: #{tpu_custom_call.1} parent=11 // pred_check
          %p303 = pneg %p160
        $region18: #{tpu_custom_call.1} parent=11 // pred_check_branch
          %305 = sbr.rel (%p303) target = $region20
        $region19: #{tpu_custom_call.1} parent=11 // pred_region
          %s307 = ssub.s32 512, 512
          %308 = vsyncadd [#allocation11], %s307
          %s309 = sshll.u32 [#allocation12], 4
          %s310 = int_to_ptr.vmem [resolvable:$true] %s309
          %315 = dma.hbm_to_vmem [thread:$0]  %s4, 512, %s310, [#allocation11], 128, 128, 8
        $region20: #{tpu_custom_call.1} parent=11 // pred_fallthru
          _
        // Predicated region
        $region21: #{tpu_custom_call.1} parent=11 // pred_check
          %p316 = pneg %p181
        $region22: #{tpu_custom_call.1} parent=11 // pred_check_branch
          %318 = sbr.rel (%p316) target = $region24
        $region23: #{tpu_custom_call.1} parent=11 // pred_region
          _
        $region24: #{tpu_custom_call.1} parent=11 // pred_fallthru
          _
        // Predicated region
        $region25: #{tpu_custom_call.1} parent=11 // pred_check
          %p319 = pneg %p202
        $region26: #{tpu_custom_call.1} parent=11 // pred_check_branch
          %321 = sbr.rel (%p319) target = $region28
        $region27: #{tpu_custom_call.1} parent=11 // pred_region
          %s323 = ssub.s32 1024, 1024
          %324 = vsyncadd [#allocation14], %s323
          %s325 = sshll.u32 [#allocation13], 4
          %s326 = int_to_ptr.vmem [resolvable:$true] %s325
          %331 = dma.hbm_to_vmem [thread:$0]  %s6, 1024, %s326, [#allocation14], 128, 128, 8
        $region28: #{tpu_custom_call.1} parent=11 // pred_fallthru
          _
        // Predicated region
        $region29: #{tpu_custom_call.1} parent=11 // pred_check
          %p332 = pneg %p223
        $region30: #{tpu_custom_call.1} parent=11 // pred_check_branch
          %334 = sbr.rel (%p332) target = $region32
        $region31: #{tpu_custom_call.1} parent=11 // pred_region
          _
        $region32: #{tpu_custom_call.1} parent=11 // pred_fallthru
          _
      $region12: #{tpu_custom_call.1} parent=5 // pred_fallthru
        _
      %p335 = scmp.lt.s32.totalorder %s26, 2
      // Predicated region
      $region33: #{tpu_custom_call.1} parent=5 // pred_check
        %p336 = pneg %p335
      $region34: #{tpu_custom_call.1} parent=5 // pred_check_branch
        %338 = sbr.rel (%p336) target = $region36
      $region35: #{tpu_custom_call.1} parent=5 // pred_region
        // Predicated region
        $region37: #{tpu_custom_call.1} parent=35 // pred_check
          %p339 = pneg %p60
        $region38: #{tpu_custom_call.1} parent=35 // pred_check_branch
          %341 = sbr.rel (%p339) target = $region40
        $region39: #{tpu_custom_call.1} parent=35 // pred_region
          %s342 = sand.u32 %s50, 1
          %s343 = scalar_lea.sflag [#allocation5], %s342
          %s344 = sand.u32 %s50, 1
          %s345 = smul.addr %s344, 32
          %s346 = scalar_lea.vmem [#allocation4], %s345
          %s347 = smul.u32 4, %s34
          %s349 = ssub.s32 512, 512
          %350 = vsyncadd %s343, %s349
          %s351 = sadd.s32 %s33, %s347
          %s352 = smul.addr %s351, 128
          %s353 = scalar_lea.hbm %s0, %s352
          %s354 = sshll.u32 %s346, 4
          %s355 = int_to_ptr.vmem [resolvable:$true] %s354
          %360 = dma.hbm_to_vmem [thread:$0]  %s353, 512, %s355, %s343, 128, 128, 8
        $region40: #{tpu_custom_call.1} parent=35 // pred_fallthru
          _
        // Predicated region
        $region41: #{tpu_custom_call.1} parent=35 // pred_check
          %p361 = pneg %p86
        $region42: #{tpu_custom_call.1} parent=35 // pred_check_branch
          %363 = sbr.rel (%p361) target = $region44
        $region43: #{tpu_custom_call.1} parent=35 // pred_region
          %s364 = sand.u32 %s26, 1
          %s365 = scalar_lea.sflag [#allocation8], %s364
          %s366 = sand.u32 %s76, 1
          %s367 = smul.addr %s366, 8
          %s368 = scalar_lea.vmem [#allocation7], %s367
          %s369 = smul.u32 4, %s34
          %s371 = ssub.s32 128, 128
          %372 = vsyncadd %s365, %s371
          %s373 = smul.addr %s369, 32
          %s374 = scalar_lea.hbm %s1, %s373
          %s375 = sshll.u32 %s368, 4
          %s376 = int_to_ptr.vmem [resolvable:$true] %s375
          %381 = dma.hbm_to_vmem [thread:$0]  %s374, 128, %s376, %s365, 32, 32, 2
        $region44: #{tpu_custom_call.1} parent=35 // pred_fallthru
          _
        // Predicated region
        $region45: #{tpu_custom_call.1} parent=35 // pred_check
          %p382 = pneg %p112
        $region46: #{tpu_custom_call.1} parent=35 // pred_check_branch
          %384 = sbr.rel (%p382) target = $region48
        $region47: #{tpu_custom_call.1} parent=35 // pred_region
          %s385 = sand.u32 %s26, 1
          %s386 = scalar_lea.sflag [#allocation8], %s385
          %s387 = sand.u32 %s102, 1
          %s388 = smul.addr %s387, 8
          %s389 = scalar_lea.vmem [#allocation9], %s388
          %s390 = smul.u32 4, %s34
          %s392 = ssub.s32 128, 128
          %393 = vsyncadd %s386, %s392
          %s394 = smul.addr %s390, 32
          %s395 = scalar_lea.hbm %s2, %s394
          %s396 = sshll.u32 %s389, 4
          %s397 = int_to_ptr.vmem [resolvable:$true] %s396
          %402 = dma.hbm_to_vmem [thread:$0]  %s395, 128, %s397, %s386, 32, 32, 2
        $region48: #{tpu_custom_call.1} parent=35 // pred_fallthru
          _
      $region36: #{tpu_custom_call.1} parent=5 // pred_fallthru
        _
      %p403 = scmp.le.s32.totalorder 1, %s26
      %p404 = scmp.lt.s32.totalorder %s26, 3
      %p405 = pnand %p403, %p404
      %p406 = pneg %p405
      // Predicated region
      $region49: #{tpu_custom_call.1} parent=5 // pred_check
        _
      $region50: #{tpu_custom_call.1} parent=5 // pred_check_branch
        %408 = sbr.rel (%p405) target = $region52
      $region51: #{tpu_custom_call.1} parent=5 // pred_region
        %s409 = ssub.s32 %s26, 1
        %s410 = sand.u32 %s53, 1
        %s411 = scalar_lea.sflag [#allocation5], %s410
        %s412 = sand.u32 %s53, 1
        %s413 = smul.addr %s412, 32
        %s414 = scalar_lea.vmem [#allocation4], %s413
        // Predicated region
        $region53: #{tpu_custom_call.1} parent=51 // pred_check
          %p415 = pneg %p66
        $region54: #{tpu_custom_call.1} parent=51 // pred_check_branch
          %417 = sbr.rel (%p415) target = $region56
        $region55: #{tpu_custom_call.1} parent=51 // pred_region
          %418 = dma.done %s411, 512
        $region56: #{tpu_custom_call.1} parent=51 // pred_fallthru
          _
        %s419 = sand.u32 %s31, 1
        %s420 = scalar_lea.sflag [#allocation8], %s419
        %s421 = sand.u32 %s79, 1
        %s422 = smul.addr %s421, 8
        %s423 = scalar_lea.vmem [#allocation7], %s422
        // Predicated region
        $region57: #{tpu_custom_call.1} parent=51 // pred_check
          %p424 = pneg %p92
        $region58: #{tpu_custom_call.1} parent=51 // pred_check_branch
          %426 = sbr.rel (%p424) target = $region60
        $region59: #{tpu_custom_call.1} parent=51 // pred_region
          %427 = dma.done %s420, 128
        $region60: #{tpu_custom_call.1} parent=51 // pred_fallthru
          _
        %s428 = sand.u32 %s31, 1
        %s429 = scalar_lea.sflag [#allocation8], %s428
        %s430 = sand.u32 %s105, 1
        %s431 = smul.addr %s430, 8
        %s432 = scalar_lea.vmem [#allocation9], %s431
        // Predicated region
        $region61: #{tpu_custom_call.1} parent=51 // pred_check
          %p433 = pneg %p118
        $region62: #{tpu_custom_call.1} parent=51 // pred_check_branch
          %435 = sbr.rel (%p433) target = $region64
        $region63: #{tpu_custom_call.1} parent=51 // pred_region
          %436 = dma.done %s429, 128
        $region64: #{tpu_custom_call.1} parent=51 // pred_fallthru
          _
        // Predicated region
        $region65: #{tpu_custom_call.1} parent=51 // pred_check
          %p437 = pneg %p139
        $region66: #{tpu_custom_call.1} parent=51 // pred_check_branch
          %439 = sbr.rel (%p437) target = $region68
        $region67: #{tpu_custom_call.1} parent=51 // pred_region
          %440 = dma.done [#allocation11], 1024
        $region68: #{tpu_custom_call.1} parent=51 // pred_fallthru
          _
        // Predicated region
        $region69: #{tpu_custom_call.1} parent=51 // pred_check
          %p441 = pneg %p160
        $region70: #{tpu_custom_call.1} parent=51 // pred_check_branch
          %443 = sbr.rel (%p441) target = $region72
        $region71: #{tpu_custom_call.1} parent=51 // pred_region
          %444 = dma.done [#allocation11], 512
        $region72: #{tpu_custom_call.1} parent=51 // pred_fallthru
          _
        // Predicated region
        $region73: #{tpu_custom_call.1} parent=51 // pred_check
          %p445 = pneg %p202
        $region74: #{tpu_custom_call.1} parent=51 // pred_check_branch
          %447 = sbr.rel (%p445) target = $region76
        $region75: #{tpu_custom_call.1} parent=51 // pred_region
          %448 = dma.done [#allocation14], 1024
        $region76: #{tpu_custom_call.1} parent=51 // pred_fallthru
          _
        %s449 = sand.u32 %s53, 1
        %s450 = scalar_lea.sflag [#allocation5], %s449
        %s451 = sand.u32 %s53, 1
        %s452 = smul.addr %s451, 32
        %s453 = scalar_lea.vmem [#allocation4], %s452
        %p454 = pneg %p66
        %p455 = pneg %p63
        %s456 = sand.u32 %s31, 1
        %s457 = scalar_lea.sflag [#allocation8], %s456
        %s458 = sand.u32 %s79, 1
        %s459 = smul.addr %s458, 8
        %s460 = scalar_lea.vmem [#allocation7], %s459
        %p461 = pneg %p92
        %p462 = pneg %p89
        %s463 = sand.u32 %s31, 1
        %s464 = scalar_lea.sflag [#allocation8], %s463
        %s465 = sand.u32 %s105, 1
        %s466 = smul.addr %s465, 8
        %s467 = scalar_lea.vmem [#allocation9], %s466
        %p468 = pneg %p118
        %p469 = pneg %p115
        %p470 = pneg %p139
        %p471 = pneg %p136
        %p472 = pneg %p160
        %p473 = pneg %p157
        %p474 = pneg %p181
        %p475 = pneg %p178
        %p476 = pneg %p202
        %p477 = pneg %p199
        %p478 = pneg %p223
        %p479 = pneg %p220
        %p480 = pneg %p249
        %p481 = pneg %p246
        %p482 = pneg %p275
        %p483 = pneg %p272
        %s484 = smul.u32 4, %s36
        %s485 = smul.u32 4, %s36
        %s486 = smul.u32 4, %s36
        %p487 = scmp.eq.s32.totalorder %s36, 0
        // Predicated region
        $region77: #{tpu_custom_call.1} parent=51 // pred_check
          %p488 = pneg %p487
        $region78: #{tpu_custom_call.1} parent=51 // pred_check_branch
          %490 = sbr.rel (%p488) target = $region80
        $region79: #{tpu_custom_call.1} parent=51 // pred_region
          %vm491 = vcmask 261120
          %492 = vst.msk [vmem:[#allocation2] sm:$0xff] %vm491, 0.0
          %493 = vst.msk [vmem:[#allocation2 + $0x8] sm:$0xff] %vm491, 0.0
          %494 = vst.msk [vmem:[#allocation2 + $0x10] sm:$0xff] %vm491, 0.0
          %495 = vst.msk [vmem:[#allocation2 + $0x18] sm:$0xff] %vm491, 0.0
          %496 = vst.msk [vmem:[#allocation3] sm:$0xff] %vm491, 0.0
          %497 = vst.msk [vmem:[#allocation3 + $0x8] sm:$0xff] %vm491, 0.0
        $region80: #{tpu_custom_call.1} parent=51 // pred_fallthru
          _
        %v498 = vld [vmem:[#allocation2] sm:$0xff]
        %s499 = scalar_lea.vmem [#allocation2], 8
        %v500 = vld [vmem:[%s499] sm:$0xff]
        %s501 = scalar_lea.vmem [#allocation2], 16
        %v502 = vld [vmem:[%s501] sm:$0xff]
        %s503 = scalar_lea.vmem [#allocation2], 24
        %v504 = vld [vmem:[%s503] sm:$0xff]
        %v505 = vld [vmem:[#allocation3] sm:$0xff]
        %s506 = scalar_lea.vmem [#allocation3], 8
        %v507 = vld [vmem:[%s506] sm:$0xff]
        loop: start=0, step=1, limit=4
        $region81: #{tpu_custom_call.1} parent=51 // loop_pre_header
          _
        $region82: #{tpu_custom_call.1} parent=51 // loop_header
          %s509 = sphi 0, %s513
          %p510 = scmp.ge.s32.totalorder %s509, 4
          %v514 = vphi %v498, %v935
          %v515 = vphi %v500, %v1058
          %v516 = vphi %v502, %v514
          %v517 = vphi %v504, %v515
          %v518 = vphi %v505, %v1062
          %v519 = vphi %v507, %v1066
        $region83: #{tpu_custom_call.1} parent=51 // loop_header_branch
          %512 = sbr.rel (%p510) target = $region87
        $region84: #{tpu_custom_call.1} parent=51 // loop_body
          %s520 = smul.u32 %s509, 8
          %s521 = scalar_lea.vmem %s414, %s520 [#allocation4]
          %v522 = vld [vmem:[%s521] sm:$0xff]
          %s523 = smul.u32 %s509, 2
          %s524 = scalar_lea.vmem %s423, %s523 [#allocation7]
          %v525 = vld [vmem:[%s524] sm:$0x3]
          %s526 = scalar_lea.vmem %s432, %s523 [#allocation9]
          %v527 = vld [vmem:[%s526] sm:$0x3]
          %v528 = vld [vmem:[#allocation10] sm:$0xff]
          %v529 = vld [vmem:[#allocation10 + $0x8] sm:$0xff]
          %v530 = vld [vmem:[#allocation10 + $0x10] sm:$0xff]
          %v531 = vld [vmem:[#allocation10 + $0x18] sm:$0xff]
          %v532 = vld [vmem:[%s5] sm:$0x1]
          %v534 = vlaneseq
          %v535 = vshrl.u32 %v534, 7
          %v536 = vsub.s32 0, %v535
          %v537 = vrot.slane %v532, %v536
          %vm539 = vcmask 261120
          %v541 = vsel %vm539, %v514, 0
          %543 = vmatprep.subr.mxu0 0.0
          %544 = vmatpush1.msra.mxu0 0.0
          %545 = vmatprep.subr.mxu0 0.0
          %546 = vmatpush1.msra.mxu0 0.0
          %547 = vmatprep.subr.mxu0 0.0
          %548 = vmatpush1.msra.mxu0 0.0
          %549 = vmatprep.subr.mxu0 0.0
          %550 = vmatpush1.msra.mxu0 0.0
          %551 = vmatprep.subr.mxu0 0.0
          %552 = vmatpush1.msra.mxu0 0.0
          %553 = vmatprep.subr.mxu0 0.0
          %554 = vmatpush1.msra.mxu0 0.0
          %555 = vmatprep.subr.mxu0 0.0
          %556 = vmatpush1.msra.mxu0 0.0
          %557 = vmatprep.subr.mxu0 0.0
          %558 = vmatpush1.msra.mxu0 0.0
          %559 = vmatprep.subr.mxu0 0.0
          %560 = vmatpush1.msra.mxu0 0.0
          %561 = vmatprep.subr.mxu0 0.0
          %562 = vmatpush1.msra.mxu0 0.0
          %563 = vmatprep.subr.mxu0 0.0
          %564 = vmatpush1.msra.mxu0 0.0
          %565 = vmatprep.subr.mxu0 0.0
          %566 = vmatpush1.msra.mxu0 0.0
          %567 = vmatprep.subr.mxu0 0.0
          %568 = vmatpush1.msra.mxu0 %v531
          %569 = vmatprep.subr.mxu0 0.0
          %570 = vmatpush1.msra.mxu0 %v530
          %571 = vmatprep.subr.mxu0 0.0
          %572 = vmatpush1.msra.mxu0 %v529
          %573 = vmatprep.subr.mxu0 0.0
          %574 = vmatpush1.msra.mxu0 %v528
          %575 = vmatprep.subr.mxu0 0.0
          %576 = vmatpush2.msra.mxu0 0.0
          %577 = vmatprep.subr.mxu0 0.0
          %578 = vmatpush2.msra.mxu0 0.0
          %579 = vmatprep.subr.mxu0 0.0
          %580 = vmatpush2.msra.mxu0 0.0
          %581 = vmatprep.subr.mxu0 0.0
          %582 = vmatpush2.msra.mxu0 0.0
          %583 = vmatprep.subr.mxu0 0.0
          %584 = vmatpush2.msra.mxu0 0.0
          %585 = vmatprep.subr.mxu0 0.0
          %586 = vmatpush2.msra.mxu0 0.0
          %587 = vmatprep.subr.mxu0 0.0
          %588 = vmatpush2.msra.mxu0 0.0
          %589 = vmatprep.subr.mxu0 0.0
          %590 = vmatpush2.msra.mxu0 0.0
          %591 = vmatprep.subr.mxu0 0.0
          %592 = vmatpush2.msra.mxu0 0.0
          %593 = vmatprep.subr.mxu0 0.0
          %594 = vmatpush2.msra.mxu0 0.0
          %595 = vmatprep.subr.mxu0 0.0
          %596 = vmatpush2.msra.mxu0 0.0
          %597 = vmatprep.subr.mxu0 0.0
          %598 = vmatpush2.msra.mxu0 0.0
          %599 = vmatprep.subr.mxu0 0.0
          %600 = vmatpush2.msra.mxu0 0.0
          %601 = vmatprep.subr.mxu0 0.0
          %602 = vmatpush2.msra.mxu0 0.0
          %603 = vmatprep.subr.mxu0 0.0
          %604 = vmatpush2.msra.mxu0 0.0
          %605 = vmatprep.subr.mxu0 0.0
          %606 = vmatpush2.msra.mxu0 0.0
          %607 = vmatprep.mubr.f32.mxu0 0.0
          %608 = vmatmul.mubr.f32.gmra.mxu0 %v541
          %v609 = vpop.f32.mrf.mxu0
          %v610 = vadd.f32 %v537, %v609
          %v611 = vpop.f32.mrf.mxu0
          %612 = vdwg.mxu0
          %s613 = scalar_lea.vmem [#allocation10], 32
          %v614 = vld [vmem:[%s613] sm:$0xff]
          %v615 = vld [vmem:[%s613 + $0x8] sm:$0xff]
          %v616 = vld [vmem:[%s613 + $0x10] sm:$0xff]
          %v617 = vld [vmem:[%s613 + $0x18] sm:$0xff]
          %s618 = scalar_lea.vmem %s5, 1
          %v619 = vld [vmem:[%s618] sm:$0x1]
          %v621 = vlaneseq
          %v622 = vshrl.u32 %v621, 7
          %v623 = vsub.s32 0, %v622
          %v624 = vrot.slane %v619, %v623
          %v627 = vsel %vm539, %v515, 0
          %629 = vmatprep.subr.mxu0 0.0
          %630 = vmatpush1.msra.mxu0 0.0
          %631 = vmatprep.subr.mxu0 0.0
          %632 = vmatpush1.msra.mxu0 0.0
          %633 = vmatprep.subr.mxu0 0.0
          %634 = vmatpush1.msra.mxu0 0.0
          %635 = vmatprep.subr.mxu0 0.0
          %636 = vmatpush1.msra.mxu0 0.0
          %637 = vmatprep.subr.mxu0 0.0
          %638 = vmatpush1.msra.mxu0 0.0
          %639 = vmatprep.subr.mxu0 0.0
          %640 = vmatpush1.msra.mxu0 0.0
          %641 = vmatprep.subr.mxu0 0.0
          %642 = vmatpush1.msra.mxu0 0.0
          %643 = vmatprep.subr.mxu0 0.0
          %644 = vmatpush1.msra.mxu0 0.0
          %645 = vmatprep.subr.mxu0 0.0
          %646 = vmatpush1.msra.mxu0 0.0
          %647 = vmatprep.subr.mxu0 0.0
          %648 = vmatpush1.msra.mxu0 0.0
          %649 = vmatprep.subr.mxu0 0.0
          %650 = vmatpush1.msra.mxu0 0.0
          %651 = vmatprep.subr.mxu0 0.0
          %652 = vmatpush1.msra.mxu0 0.0
          %653 = vmatprep.subr.mxu0 0.0
          %654 = vmatpush1.msra.mxu0 %v617
          %655 = vmatprep.subr.mxu0 0.0
          %656 = vmatpush1.msra.mxu0 %v616
          %657 = vmatprep.subr.mxu0 0.0
          %658 = vmatpush1.msra.mxu0 %v615
          %659 = vmatprep.subr.mxu0 0.0
          %660 = vmatpush1.msra.mxu0 %v614
          %661 = vmatprep.subr.mxu0 0.0
          %662 = vmatpush2.msra.mxu0 0.0
          %663 = vmatprep.subr.mxu0 0.0
          %664 = vmatpush2.msra.mxu0 0.0
          %665 = vmatprep.subr.mxu0 0.0
          %666 = vmatpush2.msra.mxu0 0.0
          %667 = vmatprep.subr.mxu0 0.0
          %668 = vmatpush2.msra.mxu0 0.0
          %669 = vmatprep.subr.mxu0 0.0
          %670 = vmatpush2.msra.mxu0 0.0
          %671 = vmatprep.subr.mxu0 0.0
          %672 = vmatpush2.msra.mxu0 0.0
          %673 = vmatprep.subr.mxu0 0.0
          %674 = vmatpush2.msra.mxu0 0.0
          %675 = vmatprep.subr.mxu0 0.0
          %676 = vmatpush2.msra.mxu0 0.0
          %677 = vmatprep.subr.mxu0 0.0
          %678 = vmatpush2.msra.mxu0 0.0
          %679 = vmatprep.subr.mxu0 0.0
          %680 = vmatpush2.msra.mxu0 0.0
          %681 = vmatprep.subr.mxu0 0.0
          %682 = vmatpush2.msra.mxu0 0.0
          %683 = vmatprep.subr.mxu0 0.0
          %684 = vmatpush2.msra.mxu0 0.0
          %685 = vmatprep.subr.mxu0 0.0
          %686 = vmatpush2.msra.mxu0 0.0
          %687 = vmatprep.subr.mxu0 0.0
          %688 = vmatpush2.msra.mxu0 0.0
          %689 = vmatprep.subr.mxu0 0.0
          %690 = vmatpush2.msra.mxu0 0.0
          %691 = vmatprep.subr.mxu0 0.0
          %692 = vmatpush2.msra.mxu0 0.0
          %693 = vmatprep.mubr.f32.mxu0 0.0
          %694 = vmatmul.mubr.f32.gmra.mxu0 %v627
          %v695 = vpop.f32.mrf.mxu0
          %v696 = vadd.f32 %v624, %v695
          %v697 = vpop.f32.mrf.mxu0
          %698 = vdwg.mxu0
          %v699 = vld [vmem:[#allocation13] sm:$0xff]
          %v700 = vld [vmem:[#allocation13 + $0x8] sm:$0xff]
          %v701 = vld [vmem:[#allocation13 + $0x10] sm:$0xff]
          %v702 = vld [vmem:[#allocation13 + $0x18] sm:$0xff]
          %v703 = vld [vmem:[%s7] sm:$0x1]
          %v705 = vlaneseq
          %v706 = vshrl.u32 %v705, 7
          %v707 = vsub.s32 0, %v706
          %v708 = vrot.slane %v703, %v707
          %v711 = vsel %vm539, %v516, 0
          %713 = vmatprep.subr.mxu0 0.0
          %714 = vmatpush1.msra.mxu0 0.0
          %715 = vmatprep.subr.mxu0 0.0
          %716 = vmatpush1.msra.mxu0 0.0
          %717 = vmatprep.subr.mxu0 0.0
          %718 = vmatpush1.msra.mxu0 0.0
          %719 = vmatprep.subr.mxu0 0.0
          %720 = vmatpush1.msra.mxu0 0.0
          %721 = vmatprep.subr.mxu0 0.0
          %722 = vmatpush1.msra.mxu0 0.0
          %723 = vmatprep.subr.mxu0 0.0
          %724 = vmatpush1.msra.mxu0 0.0
          %725 = vmatprep.subr.mxu0 0.0
          %726 = vmatpush1.msra.mxu0 0.0
          %727 = vmatprep.subr.mxu0 0.0
          %728 = vmatpush1.msra.mxu0 0.0
          %729 = vmatprep.subr.mxu0 0.0
          %730 = vmatpush1.msra.mxu0 0.0
          %731 = vmatprep.subr.mxu0 0.0
          %732 = vmatpush1.msra.mxu0 0.0
          %733 = vmatprep.subr.mxu0 0.0
          %734 = vmatpush1.msra.mxu0 0.0
          %735 = vmatprep.subr.mxu0 0.0
          %736 = vmatpush1.msra.mxu0 0.0
          %737 = vmatprep.subr.mxu0 0.0
          %738 = vmatpush1.msra.mxu0 %v702
          %739 = vmatprep.subr.mxu0 0.0
          %740 = vmatpush1.msra.mxu0 %v701
          %741 = vmatprep.subr.mxu0 0.0
          %742 = vmatpush1.msra.mxu0 %v700
          %743 = vmatprep.subr.mxu0 0.0
          %744 = vmatpush1.msra.mxu0 %v699
          %745 = vmatprep.subr.mxu0 0.0
          %746 = vmatpush2.msra.mxu0 0.0
          %747 = vmatprep.subr.mxu0 0.0
          %748 = vmatpush2.msra.mxu0 0.0
          %749 = vmatprep.subr.mxu0 0.0
          %750 = vmatpush2.msra.mxu0 0.0
          %751 = vmatprep.subr.mxu0 0.0
          %752 = vmatpush2.msra.mxu0 0.0
          %753 = vmatprep.subr.mxu0 0.0
          %754 = vmatpush2.msra.mxu0 0.0
          %755 = vmatprep.subr.mxu0 0.0
          %756 = vmatpush2.msra.mxu0 0.0
          %757 = vmatprep.subr.mxu0 0.0
          %758 = vmatpush2.msra.mxu0 0.0
          %759 = vmatprep.subr.mxu0 0.0
          %760 = vmatpush2.msra.mxu0 0.0
          %761 = vmatprep.subr.mxu0 0.0
          %762 = vmatpush2.msra.mxu0 0.0
          %763 = vmatprep.subr.mxu0 0.0
          %764 = vmatpush2.msra.mxu0 0.0
          %765 = vmatprep.subr.mxu0 0.0
          %766 = vmatpush2.msra.mxu0 0.0
          %767 = vmatprep.subr.mxu0 0.0
          %768 = vmatpush2.msra.mxu0 0.0
          %769 = vmatprep.subr.mxu0 0.0
          %770 = vmatpush2.msra.mxu0 0.0
          %771 = vmatprep.subr.mxu0 0.0
          %772 = vmatpush2.msra.mxu0 0.0
          %773 = vmatprep.subr.mxu0 0.0
          %774 = vmatpush2.msra.mxu0 0.0
          %775 = vmatprep.subr.mxu0 0.0
          %776 = vmatpush2.msra.mxu0 0.0
          %777 = vmatprep.mubr.f32.mxu0 0.0
          %778 = vmatmul.mubr.f32.gmra.mxu0 %v711
          %v779 = vpop.f32.mrf.mxu0
          %v780 = vadd.f32 %v708, %v779
          %v781 = vpop.f32.mrf.mxu0
          %782 = vdwg.mxu0
          %v783 = vxor.u32 %v780, 2147483648
          %v784 = vmul.f32 %v783, 1.442695
          %v785 = vpow.pop %v784
          %v786 = vadd.f32 %v785, 1.0
          %v787 = vrcp.pop %v786
          %v788 = vmul.f32 1.0, %v787
          %s789 = scalar_lea.vmem [#allocation13], 32
          %v790 = vld [vmem:[%s789] sm:$0xff]
          %v791 = vld [vmem:[%s789 + $0x8] sm:$0xff]
          %v792 = vld [vmem:[%s789 + $0x10] sm:$0xff]
          %v793 = vld [vmem:[%s789 + $0x18] sm:$0xff]
          %s794 = scalar_lea.vmem %s7, 1
          %v795 = vld [vmem:[%s794] sm:$0x1]
          %v797 = vlaneseq
          %v798 = vshrl.u32 %v797, 7
          %v799 = vsub.s32 0, %v798
          %v800 = vrot.slane %v795, %v799
          %v803 = vsel %vm539, %v517, 0
          %805 = vmatprep.subr.mxu0 0.0
          %806 = vmatpush1.msra.mxu0 0.0
          %807 = vmatprep.subr.mxu0 0.0
          %808 = vmatpush1.msra.mxu0 0.0
          %809 = vmatprep.subr.mxu0 0.0
          %810 = vmatpush1.msra.mxu0 0.0
          %811 = vmatprep.subr.mxu0 0.0
          %812 = vmatpush1.msra.mxu0 0.0
          %813 = vmatprep.subr.mxu0 0.0
          %814 = vmatpush1.msra.mxu0 0.0
          %815 = vmatprep.subr.mxu0 0.0
          %816 = vmatpush1.msra.mxu0 0.0
          %817 = vmatprep.subr.mxu0 0.0
          %818 = vmatpush1.msra.mxu0 0.0
          %819 = vmatprep.subr.mxu0 0.0
          %820 = vmatpush1.msra.mxu0 0.0
          %821 = vmatprep.subr.mxu0 0.0
          %822 = vmatpush1.msra.mxu0 0.0
          %823 = vmatprep.subr.mxu0 0.0
          %824 = vmatpush1.msra.mxu0 0.0
          %825 = vmatprep.subr.mxu0 0.0
          %826 = vmatpush1.msra.mxu0 0.0
          %827 = vmatprep.subr.mxu0 0.0
          %828 = vmatpush1.msra.mxu0 0.0
          %829 = vmatprep.subr.mxu0 0.0
          %830 = vmatpush1.msra.mxu0 %v793
          %831 = vmatprep.subr.mxu0 0.0
          %832 = vmatpush1.msra.mxu0 %v792
          %833 = vmatprep.subr.mxu0 0.0
          %834 = vmatpush1.msra.mxu0 %v791
          %835 = vmatprep.subr.mxu0 0.0
          %836 = vmatpush1.msra.mxu0 %v790
          %837 = vmatprep.subr.mxu0 0.0
          %838 = vmatpush2.msra.mxu0 0.0
          %839 = vmatprep.subr.mxu0 0.0
          %840 = vmatpush2.msra.mxu0 0.0
          %841 = vmatprep.subr.mxu0 0.0
          %842 = vmatpush2.msra.mxu0 0.0
          %843 = vmatprep.subr.mxu0 0.0
          %844 = vmatpush2.msra.mxu0 0.0
          %845 = vmatprep.subr.mxu0 0.0
          %846 = vmatpush2.msra.mxu0 0.0
          %847 = vmatprep.subr.mxu0 0.0
          %848 = vmatpush2.msra.mxu0 0.0
          %849 = vmatprep.subr.mxu0 0.0
          %850 = vmatpush2.msra.mxu0 0.0
          %851 = vmatprep.subr.mxu0 0.0
          %852 = vmatpush2.msra.mxu0 0.0
          %853 = vmatprep.subr.mxu0 0.0
          %854 = vmatpush2.msra.mxu0 0.0
          %855 = vmatprep.subr.mxu0 0.0
          %856 = vmatpush2.msra.mxu0 0.0
          %857 = vmatprep.subr.mxu0 0.0
          %858 = vmatpush2.msra.mxu0 0.0
          %859 = vmatprep.subr.mxu0 0.0
          %860 = vmatpush2.msra.mxu0 0.0
          %861 = vmatprep.subr.mxu0 0.0
          %862 = vmatpush2.msra.mxu0 0.0
          %863 = vmatprep.subr.mxu0 0.0
          %864 = vmatpush2.msra.mxu0 0.0
          %865 = vmatprep.subr.mxu0 0.0
          %866 = vmatpush2.msra.mxu0 0.0
          %867 = vmatprep.subr.mxu0 0.0
          %868 = vmatpush2.msra.mxu0 0.0
          %869 = vmatprep.mubr.f32.mxu0 0.0
          %870 = vmatmul.mubr.f32.gmra.mxu0 %v803
          %v871 = vpop.f32.mrf.mxu0
          %v872 = vadd.f32 %v800, %v871
          %v873 = vpop.f32.mrf.mxu0
          %874 = vdwg.mxu0
          %v875 = vxor.u32 %v872, 2147483648
          %v876 = vmul.f32 %v875, 1.442695
          %v877 = vpow.pop %v876
          %v878 = vadd.f32 %v877, 1.0
          %v879 = vrcp.pop %v878
          %v880 = vmul.f32 1.0, %v879
          %v881 = vadd.f32 %v522, %v610
          %v882 = vxor.u32 %v881, 2147483648
          %v883 = vmul.f32 %v882, 1.442695
          %v884 = vpow.pop %v883
          %v885 = vadd.f32 %v884, 1.0
          %v886 = vrcp.pop %v885
          %v887 = vmul.f32 1.0, %v886
          %v888 = vtanh.pop %v881
          %890 = vrot.lane.b32.xlu0 %v518, 32
          %v891 = vpop.permute.xlu0 %890
          %v893 = vmul.f32 %v887, %v891
          %895 = vrot.lane.b32.xlu0 %v888, 32
          %v896 = vpop.permute.xlu0 %895
          %v898 = vmul.f32 %v887, %v896
          %900 = vrot.lane.b32.xlu0 %v898, 32
          %v901 = vpop.permute.xlu0 %900
          %v903 = vadd.f32 %v893, %v901
          %v904 = vtanh.pop %v903
          %906 = vrot.lane.b32.xlu0 %v904, 32
          %v907 = vpop.permute.xlu0 %906
          %v909 = vmul.f32 %v887, %v907
          %v910 = vlaneseq
          %v911 = vshrl.u32 %v910, 7
          %v912 = vsub.s32 0, %v911
          %v913 = vrot.slane %v525, %v912
          %915 = vrot.lane.b32.xlu0 %v913, 64
          %v916 = vpop.permute.xlu0 %915
          %v918 = vmul.f32 %v909, %v916
          %v919 = vlaneseq
          %v920 = vshrl.u32 %v919, 7
          %v921 = vsub.s32 0, %v920
          %v922 = vrot.slane %v527, %v921
          %v923 = vmul.f32 %v788, %v922
          %925 = vrot.lane.b32.xlu0 %v923, 64
          %v926 = vpop.permute.xlu0 %925
          %v928 = vadd.f32 %v918, %v926
          %v929 = vld [vmem:[#allocation12] sm:$0xff]
          %v930 = vld [vmem:[#allocation12 + $0x8] sm:$0xff]
          %v931 = vld [vmem:[#allocation12 + $0x10] sm:$0xff]
          %v932 = vld [vmem:[#allocation12 + $0x18] sm:$0xff]
          %934 = vrot.lane.b32.xlu0 %v928, 64
          %v935 = vpop.permute.xlu0 %934
          %v936 = vsel %vm539, %v935, 0
          %938 = vmatprep.subr.mxu0 0.0
          %939 = vmatpush1.msra.mxu0 0.0
          %940 = vmatprep.subr.mxu0 0.0
          %941 = vmatpush1.msra.mxu0 0.0
          %942 = vmatprep.subr.mxu0 0.0
          %943 = vmatpush1.msra.mxu0 0.0
          %944 = vmatprep.subr.mxu0 0.0
          %945 = vmatpush1.msra.mxu0 0.0
          %946 = vmatprep.subr.mxu0 0.0
          %947 = vmatpush1.msra.mxu0 0.0
          %948 = vmatprep.subr.mxu0 0.0
          %949 = vmatpush1.msra.mxu0 0.0
          %950 = vmatprep.subr.mxu0 0.0
          %951 = vmatpush1.msra.mxu0 0.0
          %952 = vmatprep.subr.mxu0 0.0
          %953 = vmatpush1.msra.mxu0 0.0
          %954 = vmatprep.subr.mxu0 0.0
          %955 = vmatpush1.msra.mxu0 0.0
          %956 = vmatprep.subr.mxu0 0.0
          %957 = vmatpush1.msra.mxu0 0.0
          %958 = vmatprep.subr.mxu0 0.0
          %959 = vmatpush1.msra.mxu0 0.0
          %960 = vmatprep.subr.mxu0 0.0
          %961 = vmatpush1.msra.mxu0 0.0
          %962 = vmatprep.subr.mxu0 0.0
          %963 = vmatpush1.msra.mxu0 %v932
          %964 = vmatprep.subr.mxu0 0.0
          %965 = vmatpush1.msra.mxu0 %v931
          %966 = vmatprep.subr.mxu0 0.0
          %967 = vmatpush1.msra.mxu0 %v930
          %968 = vmatprep.subr.mxu0 0.0
          %969 = vmatpush1.msra.mxu0 %v929
          %970 = vmatprep.subr.mxu0 0.0
          %971 = vmatpush2.msra.mxu0 0.0
          %972 = vmatprep.subr.mxu0 0.0
          %973 = vmatpush2.msra.mxu0 0.0
          %974 = vmatprep.subr.mxu0 0.0
          %975 = vmatpush2.msra.mxu0 0.0
          %976 = vmatprep.subr.mxu0 0.0
          %977 = vmatpush2.msra.mxu0 0.0
          %978 = vmatprep.subr.mxu0 0.0
          %979 = vmatpush2.msra.mxu0 0.0
          %980 = vmatprep.subr.mxu0 0.0
          %981 = vmatpush2.msra.mxu0 0.0
          %982 = vmatprep.subr.mxu0 0.0
          %983 = vmatpush2.msra.mxu0 0.0
          %984 = vmatprep.subr.mxu0 0.0
          %985 = vmatpush2.msra.mxu0 0.0
          %986 = vmatprep.subr.mxu0 0.0
          %987 = vmatpush2.msra.mxu0 0.0
          %988 = vmatprep.subr.mxu0 0.0
          %989 = vmatpush2.msra.mxu0 0.0
          %990 = vmatprep.subr.mxu0 0.0
          %991 = vmatpush2.msra.mxu0 0.0
          %992 = vmatprep.subr.mxu0 0.0
          %993 = vmatpush2.msra.mxu0 0.0
          %994 = vmatprep.subr.mxu0 0.0
          %995 = vmatpush2.msra.mxu0 0.0
          %996 = vmatprep.subr.mxu0 0.0
          %997 = vmatpush2.msra.mxu0 0.0
          %998 = vmatprep.subr.mxu0 0.0
          %999 = vmatpush2.msra.mxu0 0.0
          %1000 = vmatprep.subr.mxu0 0.0
          %1001 = vmatpush2.msra.mxu0 0.0
          %1002 = vmatprep.mubr.f32.mxu0 0.0
          %1003 = vmatmul.mubr.f32.gmra.mxu0 %v936
          %v1004 = vpop.f32.mrf.mxu0
          %v1005 = vadd.f32 %v696, %v1004
          %v1006 = vpop.f32.mrf.mxu0
          %1007 = vdwg.mxu0
          %v1008 = vxor.u32 %v1005, 2147483648
          %v1009 = vmul.f32 %v1008, 1.442695
          %v1010 = vpow.pop %v1009
          %v1011 = vadd.f32 %v1010, 1.0
          %v1012 = vrcp.pop %v1011
          %v1013 = vmul.f32 1.0, %v1012
          %v1014 = vtanh.pop %v1005
          %1016 = vrot.lane.b32.xlu0 %v519, 32
          %v1017 = vpop.permute.xlu0 %1016
          %v1019 = vmul.f32 %v1013, %v1017
          %1021 = vrot.lane.b32.xlu0 %v1014, 32
          %v1022 = vpop.permute.xlu0 %1021
          %v1024 = vmul.f32 %v1013, %v1022
          %1026 = vrot.lane.b32.xlu0 %v1024, 32
          %v1027 = vpop.permute.xlu0 %1026
          %v1029 = vadd.f32 %v1019, %v1027
          %v1030 = vtanh.pop %v1029
          %1032 = vrot.lane.b32.xlu0 %v1030, 32
          %v1033 = vpop.permute.xlu0 %1032
          %v1035 = vmul.f32 %v1013, %v1033
          %v1036 = vlaneseq
          %v1037 = vshrl.u32 %v1036, 7
          %v1038 = vsub.s32 1, %v1037
          %v1039 = vrot.slane %v525, %v1038
          %1041 = vrot.lane.b32.xlu0 %v1039, 64
          %v1042 = vpop.permute.xlu0 %1041
          %v1044 = vmul.f32 %v1035, %v1042
          %v1045 = vlaneseq
          %v1046 = vshrl.u32 %v1045, 7
          %v1047 = vsub.s32 1, %v1046
          %v1048 = vrot.slane %v527, %v1047
          %v1049 = vmul.f32 %v880, %v1048
          %1051 = vrot.lane.b32.xlu0 %v1049, 64
          %v1052 = vpop.permute.xlu0 %1051
          %v1054 = vadd.f32 %v1044, %v1052
          %1057 = vrot.lane.b32.xlu0 %v1054, 64
          %v1058 = vpop.permute.xlu0 %1057
          %1061 = vrot.lane.b32.xlu0 %v903, 96
          %v1062 = vpop.permute.xlu0 %1061
          %1065 = vrot.lane.b32.xlu0 %v1029, 96
          %v1066 = vpop.permute.xlu0 %1065
        $region85: #{tpu_custom_call.1} parent=51 // loop_footer
          %s513 = sadd.s32 1, %s509
        $region86: #{tpu_custom_call.1} parent=51 // loop_footer_branch
          %508 = sbr.rel target = $region82
        $region87: #{tpu_custom_call.1} parent=51 // loop_exit
          _
        %vm1068 = vcmask 261120
        %1069 = vst.msk [vmem:[#allocation2] sm:$0xff] %vm1068, %v514
        %1070 = vst.msk [vmem:[%s499] sm:$0xff] %vm1068, %v515
        %1071 = vst.msk [vmem:[%s501] sm:$0xff] %vm1068, %v516
        %1072 = vst.msk [vmem:[%s503] sm:$0xff] %vm1068, %v517
        %1073 = vst.msk [vmem:[#allocation3] sm:$0xff] %vm1068, %v518
        %1074 = vst.msk [vmem:[#allocation15] sm:$0xff] %vm1068, %v514
        %1075 = vst.msk [vmem:[#allocation16] sm:$0xff] %vm1068, %v518
        %1076 = vst.msk [vmem:[%s506] sm:$0xff] %vm1068, %v519
        %s1077 = scalar_lea.vmem [#allocation15], 8
        %1078 = vst.msk [vmem:[%s1077] sm:$0xff] %vm1068, %v515
        %s1079 = scalar_lea.vmem [#allocation16], 8
        %1080 = vst.msk [vmem:[%s1079] sm:$0xff] %vm1068, %v519
        // Predicated region
        $region88: #{tpu_custom_call.1} parent=51 // pred_check
          %p1081 = pneg %p246
        $region89: #{tpu_custom_call.1} parent=51 // pred_check_branch
          %1083 = sbr.rel (%p1081) target = $region91
        $region90: #{tpu_custom_call.1} parent=51 // pred_region
          %s1085 = ssub.s32 256, 256
          %1086 = vsyncadd [#allocation6], %s1085
          %s1087 = smul.addr %s35, 128
          %s1088 = scalar_lea.hbm %s8, %s1087
          %s1089 = sshll.u32 [#allocation15], 4
          %s1090 = int_to_ptr.vmem [resolvable:$true] %s1089
          %1095 = dma.vmem_to_hbm [thread:$0]  %s1090, 256, %s1088, [#allocation6], 128, 128, 8
        $region91: #{tpu_custom_call.1} parent=51 // pred_fallthru
          _
        // Predicated region
        $region92: #{tpu_custom_call.1} parent=51 // pred_check
          %p1096 = pneg %p272
        $region93: #{tpu_custom_call.1} parent=51 // pred_check_branch
          %1098 = sbr.rel (%p1096) target = $region95
        $region94: #{tpu_custom_call.1} parent=51 // pred_region
          %s1100 = ssub.s32 256, 256
          %1101 = vsyncadd [#allocation17], %s1100
          %s1102 = smul.addr %s35, 128
          %s1103 = scalar_lea.hbm %s9, %s1102
          %s1104 = sshll.u32 [#allocation16], 4
          %s1105 = int_to_ptr.vmem [resolvable:$true] %s1104
          %1110 = dma.vmem_to_hbm [thread:$0]  %s1105, 256, %s1103, [#allocation17], 128, 128, 8
        $region95: #{tpu_custom_call.1} parent=51 // pred_fallthru
          _
        // Predicated region
        $region96: #{tpu_custom_call.1} parent=51 // pred_check
          %p1111 = pneg %p246
        $region97: #{tpu_custom_call.1} parent=51 // pred_check_branch
          %1113 = sbr.rel (%p1111) target = $region99
        $region98: #{tpu_custom_call.1} parent=51 // pred_region
          %1114 = dma.done [#allocation6], 256
        $region99: #{tpu_custom_call.1} parent=51 // pred_fallthru
          _
        // Predicated region
        $region100: #{tpu_custom_call.1} parent=51 // pred_check
          %p1115 = pneg %p272
        $region101: #{tpu_custom_call.1} parent=51 // pred_check_branch
          %1117 = sbr.rel (%p1115) target = $region103
        $region102: #{tpu_custom_call.1} parent=51 // pred_region
          %1118 = dma.done [#allocation17], 256
        $region103: #{tpu_custom_call.1} parent=51 // pred_fallthru
          _
      $region52: #{tpu_custom_call.1} parent=5 // pred_fallthru
        _
      %p1119 = scmp.le.s32.totalorder 2, %s26
      // Predicated region
      $region104: #{tpu_custom_call.1} parent=5 // pred_check
        %p1120 = pneg %p1119
      $region105: #{tpu_custom_call.1} parent=5 // pred_check_branch
        %1122 = sbr.rel (%p1120) target = $region107
      $region106: #{tpu_custom_call.1} parent=5 // pred_region
        %s1123 = ssub.s32 %s26, 2
      $region107: #{tpu_custom_call.1} parent=5 // pred_fallthru
        _
    $region6: #{tpu_custom_call.1} parent=1 // loop_footer
      %s30 = sadd.s32 1, %s26
    $region7: #{tpu_custom_call.1} parent=1 // loop_footer_branch
      %25 = sbr.rel target = $region3
    $region8: #{tpu_custom_call.1} parent=1 // loop_exit
      _
    %1124 = vsyncpa [#allocation5], 1
    %s1125 = scalar_lea.sflag [#allocation5], 1
    %1126 = vsyncpa %s1125, 1
    %1127 = vsyncpa [#allocation8], 1
    %s1128 = scalar_lea.sflag [#allocation8], 1
    %1129 = vsyncpa %s1128, 1
    %1130 = vsyncpa [#allocation11], 1
    %1131 = vsyncpa [#allocation14], 1
    %1132 = vsyncpa [#allocation6], 1
    %s1133 = scalar_lea.sflag [#allocation6], 1
    %1134 = vsyncpa %s1133, 1
    %1135 = vsyncpa [#allocation17], 1

</llo_original>
